<compile_context>
chip_gen: v7x
topology: tpu7x:2x2x1
jax: 0.10.0
libtpu: 0.0.40
codegen_flags: <defaults>
</compile_context>

<pallas_src>
import math

import jax
import jax.numpy as jnp
from jax.experimental import pallas as pl
from jax.experimental.pallas import tpu as pltpu


# ---------------------------------------------------------------------------
# Hardware / dtype helpers
# ---------------------------------------------------------------------------
def _tpu_caps():
    """(num TensorCores per chip, physical VMEM bytes) with safe fallbacks."""
    num_cores, vmem_bytes = 1, 128 * 1024 * 1024
    try:
        vmem_bytes = int(pltpu.get_tpu_info().vmem_capacity_bytes)
    except Exception:
        pass
    try:
        kind = jax.devices()[0].device_kind.lower()
        if "v7" in kind or "7x" in kind:
            num_cores = 2               # v7x: 2 TCs/chip -> keep >=2 grid steps
    except Exception:
        pass
    return num_cores, vmem_bytes


def _resolve_mxu_dtype(mxu_dtype):
    """bf16 MXU inputs by default on v6e/v7x, f32 elsewhere (v5e: no bf16 VPU)."""
    if mxu_dtype is not None:
        return mxu_dtype
    try:
        kind = jax.devices()[0].device_kind.lower()
        if "v6" in kind or "v7" in kind or "7x" in kind:
            return jnp.bfloat16
    except Exception:
        pass
    return jnp.float32


def _shrink_to_divisor(B, tb):
    tb = max(1, min(int(tb), B))
    while B % tb != 0:
        tb -= 1
    return tb


def _pick_block_batch(B, S, target_rows, num_cores):
    """TB s.t. TB*S ~ target_rows, TB | B; split batches only when >1 TC exists."""
    tb = max(1, min(B, max(1, target_rows // max(S, 1))))
    if num_cores >= 2 and B >= 2:
        tb = min(tb, max(1, B // num_cores))
    return _shrink_to_divisor(B, tb)


def _vmem_bytes_estimate(TB, S, D, Dh, w_itemsize, return_weights, use_flat,
                         single_buffer):
    """Rough per-step VMEM footprint (blocks + f32 temporaries)."""
    rows, f32 = TB * S, 4
    param_bufs = 1 if single_buffer else 2
    est = 2 * rows * D * f32                                  # x (double-buffered)
    est += param_bufs * (D * 3 * Dh * w_itemsize + (3 * Dh + 2 * D) * f32)
    est += 2 * TB * Dh * f32                                  # pooled out
    if return_weights:
        est += 2 * TB * S * S * f32                           # weights out
    est += rows * D * f32 + rows * 3 * Dh * f32               # xn, qkv
    if use_flat:
        est += (2 * rows * rows + rows * Dh + rows * S) * f32  # scores/w, attended, G
    else:
        est += (2 * TB * S * S + rows * Dh) * f32
    return est


# ---------------------------------------------------------------------------
# One-time host-side parameter preparation (hoisted out of the per-call path)
# ---------------------------------------------------------------------------
def prepare_params(params, *, mxu_dtype=None):
    """Fuse Wq/Wk/Wv -> Wqkv, fold 1/sqrt(D) into the Q projection, cast weights.

    Call once and reuse: doing the concat per forward call would pay an extra
    full HBM read+write of the weight slab before the kernel even starts.
    """
    mxu_dtype = _resolve_mxu_dtype(mxu_dtype)
    D = params["wq"].shape[0]
    # PyTorch: scores / sqrt(x.size(-1)) == 1/sqrt(input_dim) (even if Dh != D).
    scale = 1.0 / math.sqrt(D)
    wqkv = jnp.concatenate(
        [params["wq"] * scale, params["wk"], params["wv"]], axis=1
    ).astype(mxu_dtype)
    bqkv = jnp.concatenate(
        [params["bq"] * scale, params["bk"], params["bv"]], axis=1
    ).astype(jnp.float32)                                   # bias added to f32 acc
    return {
        "gamma": params["gamma"].astype(jnp.float32),
        "beta": params["beta"].astype(jnp.float32),
        "wqkv": wqkv,
        "bqkv": bqkv,
    }


# ---------------------------------------------------------------------------
# Kernel
# ---------------------------------------------------------------------------
def _make_kernel(S, Dh, emit_weights, flatten_weights, use_flat, approx_recip):
    def kernel(x_ref, gamma_ref, beta_ref, wqkv_ref, bqkv_ref, *out_refs):
        pooled_ref = out_refs[0]
        TB = x_ref.shape[0]
        D = x_ref.shape[2]
        rows = TB * S
        mxu_dtype = wqkv_ref.dtype

        # ---- LayerNorm (eps=1e-5) in f32 on the flattened (TB*S, D) slab ----
        # NOTE: this reshape is copy-free when S is a multiple of 8 (f32 sublanes).
        x = x_ref[...].astype(jnp.float32).reshape(rows, D)
        mean = jnp.mean(x, axis=-1, keepdims=True)
        var = jnp.mean(jnp.square(x - mean), axis=-1, keepdims=True)
        xn = (x - mean) * jax.lax.rsqrt(var + 1e-5)
        xn = xn * gamma_ref[...] + beta_ref[...]            # gamma/beta: (1, D)

        # ---- fused QKV projection: one (TB*S, D) @ (D, 3*Dh) MXU matmul -----
        # Wqkv is already in MXU dtype (host-side cast); 1/sqrt(D) already folded
        # into the Q slice of Wqkv/bqkv.
        qkv = jnp.dot(xn.astype(mxu_dtype), wqkv_ref[...],
                      preferred_element_type=jnp.float32) + bqkv_ref[...]
        q = qkv[:, :Dh]
        k = qkv[:, Dh:2 * Dh]
        v = qkv[:, 2 * Dh:]

        inv_s = 1.0 / S

        if use_flat:
            # ---- single (rows, rows) matmul + block-diagonal mask ------------
            # Avoids TB tiny (S,Dh)x(Dh,S) matmuls that underfeed the MXU.
            scores = jnp.einsum("qd,kd->qk",
                                q.astype(mxu_dtype), k.astype(mxu_dtype),
                                preferred_element_type=jnp.float32)
            ii = jax.lax.broadcasted_iota(jnp.int32, (rows, rows), 0)
            jj = jax.lax.broadcasted_iota(jnp.int32, (rows, rows), 1)
            # floor((i+0.5)/S) == i//S exactly (0.5/S margin >> f32 rounding).
            bi = jnp.floor((ii.astype(jnp.float32) + 0.5) * inv_s)
            bj = jnp.floor((jj.astype(jnp.float32) + 0.5) * inv_s)
            scores = jnp.where(bi == bj, scores, -jnp.inf)

            scores = scores - jnp.max(scores, axis=-1, keepdims=True)
            e = jnp.exp(scores)                              # exp(-inf) == 0 exactly
            w = e * pl.reciprocal(jnp.sum(e, axis=-1, keepdims=True),
                                  approx=approx_recip)

            # (dropout: identity in eval mode)

            attended = jnp.dot(w.astype(mxu_dtype), v.astype(mxu_dtype),
                               preferred_element_type=jnp.float32)
            pooled_ref[...] = jnp.mean(attended.reshape(TB, S, Dh),
                                       axis=1).astype(pooled_ref.dtype)

            if emit_weights:
                weights_ref = out_refs[1]
                # Exact per-batch weight extraction: off-block probs are exact
                # zeros, so w @ G with G[j,k] = (j mod S == k) selects the block
                # diagonal with one small f32 MXU matmul (no gathers).
                jr = jax.lax.broadcasted_iota(jnp.int32, (rows, S), 0)
                kc = jax.lax.broadcasted_iota(jnp.int32, (rows, S), 1)
                jr_f = jr.astype(jnp.float32)
                jmod = jr_f - S * jnp.floor((jr_f + 0.5) * inv_s)
                gmat = (jmod == kc.astype(jnp.float32)).astype(jnp.float32)
                w_blocks = jnp.dot(w, gmat, preferred_element_type=jnp.float32)
                if flatten_weights:
                    weights_ref[...] = w_blocks.reshape(
                        1, rows * S).astype(weights_ref.dtype)
                else:
                    weights_ref[...] = w_blocks.reshape(
                        TB, S, S).astype(weights_ref.dtype)
        else:
            # ---- fallback: per-batch batched attention ------------------------
            q3 = q.reshape(TB, S, Dh)
            k3 = k.reshape(TB, S, Dh)
            v3 = v.reshape(TB, S, Dh)
            scores = jnp.einsum("bqd,bkd->bqk",
                                q3.astype(mxu_dtype), k3.astype(mxu_dtype),
                                preferred_element_type=jnp.float32)
            scores = scores - jnp.max(scores, axis=-1, keepdims=True)
            e = jnp.exp(scores)
            w = e * pl.reciprocal(jnp.sum(e, axis=-1, keepdims=True),
                                  approx=approx_recip)
            attended = jnp.einsum("bqk,bkd->bqd",
                                  w.astype(mxu_dtype), v3.astype(mxu_dtype),
                                  preferred_element_type=jnp.float32)
            pooled_ref[...] = jnp.mean(attended, axis=1).astype(pooled_ref.dtype)
            if emit_weights:
                weights_ref = out_refs[1]
                if flatten_weights:
                    weights_ref[...] = w.reshape(
                        1, TB * S * S).astype(weights_ref.dtype)
                else:
                    weights_ref[...] = w.astype(weights_ref.dtype)

    return kernel


# ---------------------------------------------------------------------------
# Wrapper
# ---------------------------------------------------------------------------
def attention_pooling(x, params, *, block_batch=None, return_weights=True,
                      mxu_dtype=None, single_buffer_params=True):
    """x: [B, S, D] float32. Returns pooled [B, Dh] (and weights [B, S, S]).

    `params` may be the raw per-projection dict (prepared on the fly) or the
    result of prepare_params() (preferred: hoists the weight concat/cast).
    """
    B, S, D = x.shape
    prep = params if "wqkv" in params else prepare_params(params,
                                                          mxu_dtype=mxu_dtype)
    gamma, beta = prep["gamma"], prep["beta"]
    wqkv, bqkv = prep["wqkv"], prep["bqkv"]
    Dh = wqkv.shape[1] // 3
    assert wqkv.shape[0] == D

    num_cores, vmem_cap = _tpu_caps()
    target_rows = 512 if vmem_cap >= 96 * 1024 * 1024 else 256   # smaller on v7x
    if block_batch is None:
        TB = _pick_block_batch(B, S, target_rows, num_cores)
    else:
        TB = _shrink_to_divisor(B, block_batch)

    w_itemsize = wqkv.dtype.itemsize
    use_flat_cand = (S < 128) and (TB * S <= 1024)
    budget = int(0.45 * vmem_cap)
    while TB > 1 and _vmem_bytes_estimate(TB, S, D, Dh, w_itemsize,
                                          return_weights, use_flat_cand,
                                          single_buffer_params) > budget:
        TB = _shrink_to_divisor(B, TB - 1)
        use_flat_cand = (S < 128) and (TB * S <= 1024)

    flatten_cand = return_weights and (TB * S * S) % 128 == 0   # unmasked stores
    est = _vmem_bytes_estimate(TB, S, D, Dh, w_itemsize, return_weights,
                               use_flat_cand, single_buffer_params)
    vmem_limit = int(min(0.9 * vmem_cap, max(32 * 1024 * 1024, 2 * est)))
    grid = (B // TB,)
    approx_recip = (wqkv.dtype == jnp.bfloat16)   # exact recip in the f32 path

    def _run(single_buf, flat_w, use_flat):
        def const_spec(shape):
            idx = lambda b: (0,) * len(shape)
            if single_buf:
                # Resident parameters: one buffer is enough (index map constant).
                return pl.BlockSpec(shape, idx, pipeline_mode=pl.Buffered(1))
            return pl.BlockSpec(shape, idx)

        in_specs = [
            pl.BlockSpec((TB, S, D), lambda b: (b, 0, 0)),   # x
            const_spec((1, D)),                              # ln gamma
            const_spec((1, D)),                              # ln beta
            const_spec((D, 3 * Dh)),                         # fused Wqkv
            const_spec((1, 3 * Dh)),                         # fused bqkv
        ]
        out_specs = [pl.BlockSpec((TB, Dh), lambda b: (b, 0))]
        out_shapes = [jax.ShapeDtypeStruct((B, Dh), jnp.float32)]
        if return_weights:
            if flat_w:
                out_specs.append(pl.BlockSpec((1, TB * S * S), lambda b: (b, 0)))
                out_shapes.append(
                    jax.ShapeDtypeStruct((B // TB, TB * S * S), jnp.float32))
            else:
                out_specs.append(pl.BlockSpec((TB, S, S), lambda b: (b, 0, 0)))
                out_shapes.append(jax.ShapeDtypeStruct((B, S, S), jnp.float32))

        kernel = _make_kernel(S, Dh, return_weights, flat_w, use_flat,
                              approx_recip)
        grid_spec = pltpu.PrefetchScalarGridSpec(
            num_scalar_prefetch=0, grid=grid,
            in_specs=in_specs, out_specs=out_specs)
        outs = pl.pallas_call(
            kernel,
            grid_spec=grid_spec,
            out_shape=tuple(out_shapes),
            compiler_params=pltpu.CompilerParams(
                dimension_semantics=("parallel",),
                vmem_limit_bytes=vmem_limit),
        )(x, gamma, beta, wqkv, bqkv)
        return jax.block_until_ready(outs)

    # Preference-ordered attempts; last entry matches the previously-validated
    # conservative configuration (double-buffered params, no flatten, batched).
    sb = bool(single_buffer_params)
    candidates = [
        (sb, flatten_cand, use_flat_cand),
        (sb, False, use_flat_cand),
        (False, flatten_cand, use_flat_cand),
        (False, False, use_flat_cand),
        (False, False, False),
    ]
    seen, cand_list = set(), []
    for c in candidates:
        if c not in seen:
            seen.add(c)
            cand_list.append(c)

    outs, flatten_used, err = None, False, None
    for single_buf, flat_w, use_flat in cand_list:
        try:
            outs = _run(single_buf, flat_w, use_flat)
            flatten_used = flat_w
            break
        except Exception as e:       # graceful degradation across JAX versions
            err = e
    if outs is None:
        raise err

    if not return_weights:
        return outs[0] if isinstance(outs, (tuple, list)) else outs
    pooled, weights = outs
    if flatten_used:
        weights = weights.reshape(B, S, S)
    return pooled, weights


# ---------------------------------------------------------------------------
# Synthetic params + pure-JAX reference
# ---------------------------------------------------------------------------
def init_params(key, input_dim, attention_resc=1):
    out_dim = input_dim // attention_resc
    ks = jax.random.split(key, 6)
    bound = 1.0 / math.sqrt(input_dim)
    uni = lambda k, shape: jax.random.uniform(k, shape, jnp.float32, -bound, bound)
    return {
        "gamma": jnp.ones((1, input_dim), jnp.float32),
        "beta": jnp.zeros((1, input_dim), jnp.float32),
        # stored already transposed: [in_dim, out_dim]
        "wq": uni(ks[0], (input_dim, out_dim)),
        "bq": uni(ks[1], (1, out_dim)),
        "wk": uni(ks[2], (input_dim, out_dim)),
        "bk": uni(ks[3], (1, out_dim)),
        "wv": uni(ks[4], (input_dim, out_dim)),
        "bv": uni(ks[5], (1, out_dim)),
    }


def _reference(x, p):
    mean = jnp.mean(x, axis=-1, keepdims=True)
    var = jnp.mean((x - mean) ** 2, axis=-1, keepdims=True)
    xn = (x - mean) / jnp.sqrt(var + 1e-5) * p["gamma"][0] + p["beta"][0]
    q = xn @ p["wq"] + p["bq"][0]
    k = xn @ p["wk"] + p["bk"][0]
    v = xn @ p["wv"] + p["bv"][0]
    scores = jnp.einsum("bqd,bkd->bqk", q, k) / math.sqrt(x.shape[-1])
    w = jax.nn.softmax(scores, axis=-1)
    attended = jnp.einsum("bqk,bkd->bqd", w, v)
    return attended.mean(axis=1), w


if __name__ == "__main__":
    B, S, D = 2, 8, 32        # batch, num_slices, input_dim
    key = jax.random.PRNGKey(0)
    kx, kp = jax.random.split(key)
    x = jax.random.normal(kx, (B, S, D), dtype=jnp.float32)
    params = init_params(kp, D, attention_resc=1)

    ref_pooled, ref_weights = _reference(x, params)

    # One-time host-side param prep (concat + scale fold), reused across calls.
    prep_f32 = prepare_params(params, mxu_dtype=jnp.float32)

    pooled, weights = attention_pooling(x, prep_f32)
    pooled = jax.block_until_ready(pooled)
    weights = jax.block_until_ready(weights)
    assert pooled.shape == (B, D) and weights.shape == (B, S, S)
    assert jnp.allclose(pooled, ref_pooled, atol=1e-4, rtol=1e-4)
    assert jnp.allclose(weights, ref_weights, atol=1e-4, rtol=1e-4)

    # Pooled-only path: skips the attention-weights HBM writeback entirely.
    pooled_only = jax.block_until_ready(
        attention_pooling(x, prep_f32, return_weights=False))
    assert pooled_only.shape == (B, D)
    assert jnp.allclose(pooled_only, ref_pooled, atol=1e-4, rtol=1e-4)

    # bf16-MXU-input fast path (native on v6e/v7x); weights slab cast host-side,
    # all LayerNorm/softmax/accumulation math stays f32.
    prep_bf16 = prepare_params(params, mxu_dtype=jnp.bfloat16)
    pooled_bf16, weights_bf16 = attention_pooling(x, prep_bf16)
    pooled_bf16 = jax.block_until_ready(pooled_bf16)
    weights_bf16 = jax.block_until_ready(weights_bf16)
    assert jnp.allclose(pooled_bf16, ref_pooled, atol=5e-2, rtol=5e-2)
    assert jnp.allclose(weights_bf16, ref_weights, atol=5e-2, rtol=5e-2)

    print("KERNEL_OK")
</pallas_src>

<mosaic_0001>
module attributes {stable_mosaic.version = 11 : i64} {
  func.func @kernel(%arg0: i32, %arg1: memref<2x8x32xf32, #tpu.memory_space<vmem>>, %arg2: memref<1x32xf32, #tpu.memory_space<vmem>>, %arg3: memref<1x32xf32, #tpu.memory_space<vmem>>, %arg4: memref<32x96xf32, #tpu.memory_space<vmem>>, %arg5: memref<1x96xf32, #tpu.memory_space<vmem>>, %arg6: memref<2x32xf32, #tpu.memory_space<vmem>>, %arg7: memref<1x128xf32, #tpu.memory_space<vmem>>) attributes {dimension_semantics = [#tpu.dimension_semantics<parallel>], iteration_bounds = array<i64: 1>, scalar_prefetch = 0 : i64, scratch_operands = 0 : i64, tpu.core_type = #tpu.core_type<tc>, window_params = [{transform_indices = @transform_0, window_bounds = array<i64: 2, 8, 32>}, {pipeline_mode = #tpu.pipeline_mode<synchronous>, transform_indices = @transform_1, window_bounds = array<i64: 1, 32>}, {pipeline_mode = #tpu.pipeline_mode<synchronous>, transform_indices = @transform_2, window_bounds = array<i64: 1, 32>}, {pipeline_mode = #tpu.pipeline_mode<synchronous>, transform_indices = @transform_3, window_bounds = array<i64: 32, 96>}, {pipeline_mode = #tpu.pipeline_mode<synchronous>, transform_indices = @transform_4, window_bounds = array<i64: 1, 96>}, {transform_indices = @transform_5, window_bounds = array<i64: 2, 32>}, {transform_indices = @transform_6, window_bounds = array<i64: 1, 128>}]} {
    %c0 = arith.constant 0 : index
    %c0_0 = arith.constant 0 : index
    %c0_1 = arith.constant 0 : index
    %0 = vector.load %arg1[%c0, %c0_0, %c0_1] : memref<2x8x32xf32, #tpu.memory_space<vmem>>, vector<2x8x32xf32>
    %1 = vector.shape_cast %0 : vector<2x8x32xf32> to vector<16x32xf32>
    %cst = arith.constant dense<0.000000e+00> : vector<16xf32>
    %2 = vector.multi_reduction <add>, %1, %cst [1] : vector<16x32xf32> to vector<16xf32>
    %3 = vector.shape_cast %2 : vector<16xf32> to vector<16x1xf32>
    %cst_2 = arith.constant 3.200000e+01 : f32
    %4 = vector.broadcast %cst_2 : f32 to vector<16x1xf32>
    %5 = arith.divf %3, %4 : vector<16x1xf32>
    %6 = vector.broadcast %5 : vector<16x1xf32> to vector<16x32xf32>
    %7 = arith.subf %1, %6 : vector<16x32xf32>
    %8 = arith.mulf %7, %7 : vector<16x32xf32>
    %cst_3 = arith.constant dense<0.000000e+00> : vector<16xf32>
    %9 = vector.multi_reduction <add>, %8, %cst_3 [1] : vector<16x32xf32> to vector<16xf32>
    %10 = vector.shape_cast %9 : vector<16xf32> to vector<16x1xf32>
    %cst_4 = arith.constant 3.200000e+01 : f32
    %11 = vector.broadcast %cst_4 : f32 to vector<16x1xf32>
    %12 = arith.divf %10, %11 : vector<16x1xf32>
    %13 = vector.broadcast %5 : vector<16x1xf32> to vector<16x32xf32>
    %14 = arith.subf %1, %13 : vector<16x32xf32>
    %cst_5 = arith.constant 9.99999974E-6 : f32
    %15 = vector.broadcast %cst_5 : f32 to vector<16x1xf32>
    %16 = arith.addf %12, %15 : vector<16x1xf32>
    %17 = math.rsqrt %16 : vector<16x1xf32>
    %18 = vector.broadcast %17 : vector<16x1xf32> to vector<16x32xf32>
    %19 = arith.mulf %14, %18 : vector<16x32xf32>
    %c0_6 = arith.constant 0 : index
    %c0_7 = arith.constant 0 : index
    %20 = vector.load %arg2[%c0_6, %c0_7] : memref<1x32xf32, #tpu.memory_space<vmem>>, vector<1x32xf32>
    %21 = vector.broadcast %20 : vector<1x32xf32> to vector<16x32xf32>
    %22 = arith.mulf %19, %21 : vector<16x32xf32>
    %c0_8 = arith.constant 0 : index
    %c0_9 = arith.constant 0 : index
    %23 = vector.load %arg3[%c0_8, %c0_9] : memref<1x32xf32, #tpu.memory_space<vmem>>, vector<1x32xf32>
    %24 = vector.broadcast %23 : vector<1x32xf32> to vector<16x32xf32>
    %25 = arith.addf %22, %24 : vector<16x32xf32>
    %c0_10 = arith.constant 0 : index
    %c0_11 = arith.constant 0 : index
    %26 = vector.load %arg4[%c0_10, %c0_11] : memref<32x96xf32, #tpu.memory_space<vmem>>, vector<32x96xf32>
    %cst_12 = arith.constant dense<0.000000e+00> : vector<16x96xf32>
    %27 = tpu.matmul %25, %26, %cst_12 {dimension_numbers = #tpu.dot_dimension_numbers<[1], [0], [0], [1], [0, 0, 1, 1], [], []>} : vector<16x32xf32>, vector<32x96xf32>, vector<16x96xf32> -> vector<16x96xf32>
    %c0_13 = arith.constant 0 : index
    %c0_14 = arith.constant 0 : index
    %28 = vector.load %arg5[%c0_13, %c0_14] : memref<1x96xf32, #tpu.memory_space<vmem>>, vector<1x96xf32>
    %29 = vector.broadcast %28 : vector<1x96xf32> to vector<16x96xf32>
    %30 = arith.addf %27, %29 : vector<16x96xf32>
    %31 = vector.extract_strided_slice %30 {offsets = [0, 0], sizes = [16, 32], strides = [1, 1]} : vector<16x96xf32> to vector<16x32xf32>
    %32 = vector.extract_strided_slice %30 {offsets = [0, 32], sizes = [16, 32], strides = [1, 1]} : vector<16x96xf32> to vector<16x32xf32>
    %33 = vector.extract_strided_slice %30 {offsets = [0, 64], sizes = [16, 32], strides = [1, 1]} : vector<16x96xf32> to vector<16x32xf32>
    "tpu.trace_start"() <{level = 10 : i32, message = "qd,kd->qk"}> : () -> ()
    %cst_15 = arith.constant dense<0.000000e+00> : vector<16x16xf32>
    %34 = tpu.matmul %31, %32, %cst_15 {dimension_numbers = #tpu.dot_dimension_numbers<[1], [1], [0], [0], [0, 0, 1, 0], [], []>} : vector<16x32xf32>, vector<16x32xf32>, vector<16x16xf32> -> vector<16x16xf32>
    "tpu.trace_stop"() : () -> ()
    %35 = tpu.iota {dimensions = array<i32: 0>} : vector<16x16xi32>
    %36 = tpu.iota {dimensions = array<i32: 1>} : vector<16x16xi32>
    %37 = arith.sitofp %35 : vector<16x16xi32> to vector<16x16xf32>
    %cst_16 = arith.constant 5.000000e-01 : f32
    %38 = vector.broadcast %cst_16 : f32 to vector<16x16xf32>
    %39 = arith.addf %37, %38 : vector<16x16xf32>
    %cst_17 = arith.constant 1.250000e-01 : f32
    %40 = vector.broadcast %cst_17 : f32 to vector<16x16xf32>
    %41 = arith.mulf %39, %40 : vector<16x16xf32>
    %42 = math.floor %41 : vector<16x16xf32>
    %43 = arith.sitofp %36 : vector<16x16xi32> to vector<16x16xf32>
    %cst_18 = arith.constant 5.000000e-01 : f32
    %44 = vector.broadcast %cst_18 : f32 to vector<16x16xf32>
    %45 = arith.addf %43, %44 : vector<16x16xf32>
    %cst_19 = arith.constant 1.250000e-01 : f32
    %46 = vector.broadcast %cst_19 : f32 to vector<16x16xf32>
    %47 = arith.mulf %45, %46 : vector<16x16xf32>
    %48 = math.floor %47 : vector<16x16xf32>
    %49 = arith.cmpf oeq, %42, %48 : vector<16x16xf32>
    %cst_20 = arith.constant 0xFF800000 : f32
    %50 = vector.broadcast %cst_20 : f32 to vector<16x16xf32>
    %51 = arith.select %49, %34, %50 : vector<16x16xi1>, vector<16x16xf32>
    %cst_21 = arith.constant dense<0xFF800000> : vector<16xf32>
    %52 = vector.multi_reduction <maximumf>, %51, %cst_21 [1] : vector<16x16xf32> to vector<16xf32>
    %53 = vector.shape_cast %52 : vector<16xf32> to vector<16x1xf32>
    %54 = vector.broadcast %53 : vector<16x1xf32> to vector<16x16xf32>
    %55 = arith.subf %51, %54 : vector<16x16xf32>
    %56 = math.exp %55 : vector<16x16xf32>
    %cst_22 = arith.constant dense<0.000000e+00> : vector<16xf32>
    %57 = vector.multi_reduction <add>, %56, %cst_22 [1] : vector<16x16xf32> to vector<16xf32>
    %58 = vector.shape_cast %57 : vector<16xf32> to vector<16x1xf32>
    %59 = tpu.reciprocal %58 : vector<16x1xf32> -> vector<16x1xf32>
    %60 = vector.broadcast %59 : vector<16x1xf32> to vector<16x16xf32>
    %61 = arith.mulf %56, %60 : vector<16x16xf32>
    %cst_23 = arith.constant dense<0.000000e+00> : vector<16x32xf32>
    %62 = tpu.matmul %61, %33, %cst_23 {dimension_numbers = #tpu.dot_dimension_numbers<[1], [0], [0], [1], [0, 0, 1, 1], [], []>} : vector<16x16xf32>, vector<16x32xf32>, vector<16x32xf32> -> vector<16x32xf32>
    %63 = vector.shape_cast %62 : vector<16x32xf32> to vector<2x8x32xf32>
    %cst_24 = arith.constant dense<0.000000e+00> : vector<2x32xf32>
    %64 = vector.multi_reduction <add>, %63, %cst_24 [1] : vector<2x8x32xf32> to vector<2x32xf32>
    %cst_25 = arith.constant 8.000000e+00 : f32
    %65 = vector.broadcast %cst_25 : f32 to vector<2x32xf32>
    %66 = arith.divf %64, %65 : vector<2x32xf32>
    %c0_26 = arith.constant 0 : index
    %c0_27 = arith.constant 0 : index
    %67 = vector.load %arg6[%c0_26, %c0_27] : memref<2x32xf32, #tpu.memory_space<vmem>>, vector<2x32xf32>
    tpu.vector_store %arg6[%c0_26, %c0_27], %66 {strides = array<i32>} : memref<2x32xf32, #tpu.memory_space<vmem>>, vector<2x32xf32>,
    %68 = tpu.iota {dimensions = array<i32: 0>} : vector<16x8xi32>
    %69 = tpu.iota {dimensions = array<i32: 1>} : vector<16x8xi32>
    %70 = arith.sitofp %68 : vector<16x8xi32> to vector<16x8xf32>
    %cst_28 = arith.constant 5.000000e-01 : f32
    %71 = vector.broadcast %cst_28 : f32 to vector<16x8xf32>
    %72 = arith.addf %70, %71 : vector<16x8xf32>
    %cst_29 = arith.constant 1.250000e-01 : f32
    %73 = vector.broadcast %cst_29 : f32 to vector<16x8xf32>
    %74 = arith.mulf %72, %73 : vector<16x8xf32>
    %75 = math.floor %74 : vector<16x8xf32>
    %cst_30 = arith.constant 8.000000e+00 : f32
    %76 = vector.broadcast %cst_30 : f32 to vector<16x8xf32>
    %77 = arith.mulf %76, %75 : vector<16x8xf32>
    %78 = arith.subf %70, %77 : vector<16x8xf32>
    %79 = arith.sitofp %69 : vector<16x8xi32> to vector<16x8xf32>
    %80 = arith.cmpf oeq, %78, %79 : vector<16x8xf32>
    %81 = arith.extui %80 : vector<16x8xi1> to vector<16x8xi32>
    %82 = arith.sitofp %81 : vector<16x8xi32> to vector<16x8xf32>
    %cst_31 = arith.constant dense<0.000000e+00> : vector<16x8xf32>
    %83 = tpu.matmul %61, %82, %cst_31 {dimension_numbers = #tpu.dot_dimension_numbers<[1], [0], [0], [1], [0, 0, 1, 1], [], []>} : vector<16x16xf32>, vector<16x8xf32>, vector<16x8xf32> -> vector<16x8xf32>
    %84 = vector.shape_cast %83 : vector<16x8xf32> to vector<1x128xf32>
    %c0_32 = arith.constant 0 : index
    %c0_33 = arith.constant 0 : index
    %85 = vector.load %arg7[%c0_32, %c0_33] : memref<1x128xf32, #tpu.memory_space<vmem>>, vector<1x128xf32>
    tpu.vector_store %arg7[%c0_32, %c0_33], %84 {strides = array<i32>} : memref<1x128xf32, #tpu.memory_space<vmem>>, vector<1x128xf32>,
    return
  }
  func.func @transform_0(%arg0: i32) -> (i32, i32, i32) {
    %c0_i32 = arith.constant 0 : i32
    %c0_i32_0 = arith.constant 0 : i32
    %c0_i32_1 = arith.constant 0 : i32
    return %arg0, %c0_i32, %c0_i32_0 : i32, i32, i32
  }
  func.func @transform_1(%arg0: i32) -> (i32, i32) {
    %c0_i32 = arith.constant 0 : i32
    %c0_i32_0 = arith.constant 0 : i32
    %c0_i32_1 = arith.constant 0 : i32
    return %c0_i32, %c0_i32_0 : i32, i32
  }
  func.func @transform_2(%arg0: i32) -> (i32, i32) {
    %c0_i32 = arith.constant 0 : i32
    %c0_i32_0 = arith.constant 0 : i32
    %c0_i32_1 = arith.constant 0 : i32
    return %c0_i32, %c0_i32_0 : i32, i32
  }
  func.func @transform_3(%arg0: i32) -> (i32, i32) {
    %c0_i32 = arith.constant 0 : i32
    %c0_i32_0 = arith.constant 0 : i32
    %c0_i32_1 = arith.constant 0 : i32
    return %c0_i32, %c0_i32_0 : i32, i32
  }
  func.func @transform_4(%arg0: i32) -> (i32, i32) {
    %c0_i32 = arith.constant 0 : i32
    %c0_i32_0 = arith.constant 0 : i32
    %c0_i32_1 = arith.constant 0 : i32
    return %c0_i32, %c0_i32_0 : i32, i32
  }
  func.func @transform_5(%arg0: i32) -> (i32, i32) {
    %c0_i32 = arith.constant 0 : i32
    %c0_i32_0 = arith.constant 0 : i32
    return %arg0, %c0_i32 : i32, i32
  }
  func.func @transform_6(%arg0: i32) -> (i32, i32) {
    %c0_i32 = arith.constant 0 : i32
    %c0_i32_0 = arith.constant 0 : i32
    return %arg0, %c0_i32 : i32, i32
  }
}

module attributes {stable_mosaic.version = 11 : i64} {
  func.func @kernel(%arg0: i32, %arg1: memref<2x8x32xf32, #tpu.memory_space<vmem>>, %arg2: memref<1x32xf32, #tpu.memory_space<vmem>>, %arg3: memref<1x32xf32, #tpu.memory_space<vmem>>, %arg4: memref<32x96xf32, #tpu.memory_space<vmem>>, %arg5: memref<1x96xf32, #tpu.memory_space<vmem>>, %arg6: memref<2x32xf32, #tpu.memory_space<vmem>>, %arg7: memref<2x8x8xf32, #tpu.memory_space<vmem>>) attributes {dimension_semantics = [#tpu.dimension_semantics<parallel>], iteration_bounds = array<i64: 1>, scalar_prefetch = 0 : i64, scratch_operands = 0 : i64, tpu.core_type = #tpu.core_type<tc>, window_params = [{transform_indices = @transform_0, window_bounds = array<i64: 2, 8, 32>}, {pipeline_mode = #tpu.pipeline_mode<synchronous>, transform_indices = @transform_1, window_bounds = array<i64: 1, 32>}, {pipeline_mode = #tpu.pipeline_mode<synchronous>, transform_indices = @transform_2, window_bounds = array<i64: 1, 32>}, {pipeline_mode = #tpu.pipeline_mode<synchronous>, transform_indices = @transform_3, window_bounds = array<i64: 32, 96>}, {pipeline_mode = #tpu.pipeline_mode<synchronous>, transform_indices = @transform_4, window_bounds = array<i64: 1, 96>}, {transform_indices = @transform_5, window_bounds = array<i64: 2, 32>}, {transform_indices = @transform_6, window_bounds = array<i64: 2, 8, 8>}]} {
    %c0 = arith.constant 0 : index
    %c0_0 = arith.constant 0 : index
    %c0_1 = arith.constant 0 : index
    %0 = vector.load %arg1[%c0, %c0_0, %c0_1] : memref<2x8x32xf32, #tpu.memory_space<vmem>>, vector<2x8x32xf32>
    %1 = vector.shape_cast %0 : vector<2x8x32xf32> to vector<16x32xf32>
    %cst = arith.constant dense<0.000000e+00> : vector<16xf32>
    %2 = vector.multi_reduction <add>, %1, %cst [1] : vector<16x32xf32> to vector<16xf32>
    %3 = vector.shape_cast %2 : vector<16xf32> to vector<16x1xf32>
    %cst_2 = arith.constant 3.200000e+01 : f32
    %4 = vector.broadcast %cst_2 : f32 to vector<16x1xf32>
    %5 = arith.divf %3, %4 : vector<16x1xf32>
    %6 = vector.broadcast %5 : vector<16x1xf32> to vector<16x32xf32>
    %7 = arith.subf %1, %6 : vector<16x32xf32>
    %8 = arith.mulf %7, %7 : vector<16x32xf32>
    %cst_3 = arith.constant dense<0.000000e+00> : vector<16xf32>
    %9 = vector.multi_reduction <add>, %8, %cst_3 [1] : vector<16x32xf32> to vector<16xf32>
    %10 = vector.shape_cast %9 : vector<16xf32> to vector<16x1xf32>
    %cst_4 = arith.constant 3.200000e+01 : f32
    %11 = vector.broadcast %cst_4 : f32 to vector<16x1xf32>
    %12 = arith.divf %10, %11 : vector<16x1xf32>
    %13 = vector.broadcast %5 : vector<16x1xf32> to vector<16x32xf32>
    %14 = arith.subf %1, %13 : vector<16x32xf32>
    %cst_5 = arith.constant 9.99999974E-6 : f32
    %15 = vector.broadcast %cst_5 : f32 to vector<16x1xf32>
    %16 = arith.addf %12, %15 : vector<16x1xf32>
    %17 = math.rsqrt %16 : vector<16x1xf32>
    %18 = vector.broadcast %17 : vector<16x1xf32> to vector<16x32xf32>
    %19 = arith.mulf %14, %18 : vector<16x32xf32>
    %c0_6 = arith.constant 0 : index
    %c0_7 = arith.constant 0 : index
    %20 = vector.load %arg2[%c0_6, %c0_7] : memref<1x32xf32, #tpu.memory_space<vmem>>, vector<1x32xf32>
    %21 = vector.broadcast %20 : vector<1x32xf32> to vector<16x32xf32>
    %22 = arith.mulf %19, %21 : vector<16x32xf32>
    %c0_8 = arith.constant 0 : index
    %c0_9 = arith.constant 0 : index
    %23 = vector.load %arg3[%c0_8, %c0_9] : memref<1x32xf32, #tpu.memory_space<vmem>>, vector<1x32xf32>
    %24 = vector.broadcast %23 : vector<1x32xf32> to vector<16x32xf32>
    %25 = arith.addf %22, %24 : vector<16x32xf32>
    %c0_10 = arith.constant 0 : index
    %c0_11 = arith.constant 0 : index
    %26 = vector.load %arg4[%c0_10, %c0_11] : memref<32x96xf32, #tpu.memory_space<vmem>>, vector<32x96xf32>
    %cst_12 = arith.constant dense<0.000000e+00> : vector<16x96xf32>
    %27 = tpu.matmul %25, %26, %cst_12 {dimension_numbers = #tpu.dot_dimension_numbers<[1], [0], [0], [1], [0, 0, 1, 1], [], []>} : vector<16x32xf32>, vector<32x96xf32>, vector<16x96xf32> -> vector<16x96xf32>
    %c0_13 = arith.constant 0 : index
    %c0_14 = arith.constant 0 : index
    %28 = vector.load %arg5[%c0_13, %c0_14] : memref<1x96xf32, #tpu.memory_space<vmem>>, vector<1x96xf32>
    %29 = vector.broadcast %28 : vector<1x96xf32> to vector<16x96xf32>
    %30 = arith.addf %27, %29 : vector<16x96xf32>
    %31 = vector.extract_strided_slice %30 {offsets = [0, 0], sizes = [16, 32], strides = [1, 1]} : vector<16x96xf32> to vector<16x32xf32>
    %32 = vector.extract_strided_slice %30 {offsets = [0, 32], sizes = [16, 32], strides = [1, 1]} : vector<16x96xf32> to vector<16x32xf32>
    %33 = vector.extract_strided_slice %30 {offsets = [0, 64], sizes = [16, 32], strides = [1, 1]} : vector<16x96xf32> to vector<16x32xf32>
    "tpu.trace_start"() <{level = 10 : i32, message = "qd,kd->qk"}> : () -> ()
    %cst_15 = arith.constant dense<0.000000e+00> : vector<16x16xf32>
    %34 = tpu.matmul %31, %32, %cst_15 {dimension_numbers = #tpu.dot_dimension_numbers<[1], [1], [0], [0], [0, 0, 1, 0], [], []>} : vector<16x32xf32>, vector<16x32xf32>, vector<16x16xf32> -> vector<16x16xf32>
    "tpu.trace_stop"() : () -> ()
    %35 = tpu.iota {dimensions = array<i32: 0>} : vector<16x16xi32>
    %36 = tpu.iota {dimensions = array<i32: 1>} : vector<16x16xi32>
    %37 = arith.sitofp %35 : vector<16x16xi32> to vector<16x16xf32>
    %cst_16 = arith.constant 5.000000e-01 : f32
    %38 = vector.broadcast %cst_16 : f32 to vector<16x16xf32>
    %39 = arith.addf %37, %38 : vector<16x16xf32>
    %cst_17 = arith.constant 1.250000e-01 : f32
    %40 = vector.broadcast %cst_17 : f32 to vector<16x16xf32>
    %41 = arith.mulf %39, %40 : vector<16x16xf32>
    %42 = math.floor %41 : vector<16x16xf32>
    %43 = arith.sitofp %36 : vector<16x16xi32> to vector<16x16xf32>
    %cst_18 = arith.constant 5.000000e-01 : f32
    %44 = vector.broadcast %cst_18 : f32 to vector<16x16xf32>
    %45 = arith.addf %43, %44 : vector<16x16xf32>
    %cst_19 = arith.constant 1.250000e-01 : f32
    %46 = vector.broadcast %cst_19 : f32 to vector<16x16xf32>
    %47 = arith.mulf %45, %46 : vector<16x16xf32>
    %48 = math.floor %47 : vector<16x16xf32>
    %49 = arith.cmpf oeq, %42, %48 : vector<16x16xf32>
    %cst_20 = arith.constant 0xFF800000 : f32
    %50 = vector.broadcast %cst_20 : f32 to vector<16x16xf32>
    %51 = arith.select %49, %34, %50 : vector<16x16xi1>, vector<16x16xf32>
    %cst_21 = arith.constant dense<0xFF800000> : vector<16xf32>
    %52 = vector.multi_reduction <maximumf>, %51, %cst_21 [1] : vector<16x16xf32> to vector<16xf32>
    %53 = vector.shape_cast %52 : vector<16xf32> to vector<16x1xf32>
    %54 = vector.broadcast %53 : vector<16x1xf32> to vector<16x16xf32>
    %55 = arith.subf %51, %54 : vector<16x16xf32>
    %56 = math.exp %55 : vector<16x16xf32>
    %cst_22 = arith.constant dense<0.000000e+00> : vector<16xf32>
    %57 = vector.multi_reduction <add>, %56, %cst_22 [1] : vector<16x16xf32> to vector<16xf32>
    %58 = vector.shape_cast %57 : vector<16xf32> to vector<16x1xf32>
    %59 = tpu.reciprocal %58 : vector<16x1xf32> -> vector<16x1xf32>
    %60 = vector.broadcast %59 : vector<16x1xf32> to vector<16x16xf32>
    %61 = arith.mulf %56, %60 : vector<16x16xf32>
    %cst_23 = arith.constant dense<0.000000e+00> : vector<16x32xf32>
    %62 = tpu.matmul %61, %33, %cst_23 {dimension_numbers = #tpu.dot_dimension_numbers<[1], [0], [0], [1], [0, 0, 1, 1], [], []>} : vector<16x16xf32>, vector<16x32xf32>, vector<16x32xf32> -> vector<16x32xf32>
    %63 = vector.shape_cast %62 : vector<16x32xf32> to vector<2x8x32xf32>
    %cst_24 = arith.constant dense<0.000000e+00> : vector<2x32xf32>
    %64 = vector.multi_reduction <add>, %63, %cst_24 [1] : vector<2x8x32xf32> to vector<2x32xf32>
    %cst_25 = arith.constant 8.000000e+00 : f32
    %65 = vector.broadcast %cst_25 : f32 to vector<2x32xf32>
    %66 = arith.divf %64, %65 : vector<2x32xf32>
    %c0_26 = arith.constant 0 : index
    %c0_27 = arith.constant 0 : index
    %67 = vector.load %arg6[%c0_26, %c0_27] : memref<2x32xf32, #tpu.memory_space<vmem>>, vector<2x32xf32>
    tpu.vector_store %arg6[%c0_26, %c0_27], %66 {strides = array<i32>} : memref<2x32xf32, #tpu.memory_space<vmem>>, vector<2x32xf32>,
    %68 = tpu.iota {dimensions = array<i32: 0>} : vector<16x8xi32>
    %69 = tpu.iota {dimensions = array<i32: 1>} : vector<16x8xi32>
    %70 = arith.sitofp %68 : vector<16x8xi32> to vector<16x8xf32>
    %cst_28 = arith.constant 5.000000e-01 : f32
    %71 = vector.broadcast %cst_28 : f32 to vector<16x8xf32>
    %72 = arith.addf %70, %71 : vector<16x8xf32>
    %cst_29 = arith.constant 1.250000e-01 : f32
    %73 = vector.broadcast %cst_29 : f32 to vector<16x8xf32>
    %74 = arith.mulf %72, %73 : vector<16x8xf32>
    %75 = math.floor %74 : vector<16x8xf32>
    %cst_30 = arith.constant 8.000000e+00 : f32
    %76 = vector.broadcast %cst_30 : f32 to vector<16x8xf32>
    %77 = arith.mulf %76, %75 : vector<16x8xf32>
    %78 = arith.subf %70, %77 : vector<16x8xf32>
    %79 = arith.sitofp %69 : vector<16x8xi32> to vector<16x8xf32>
    %80 = arith.cmpf oeq, %78, %79 : vector<16x8xf32>
    %81 = arith.extui %80 : vector<16x8xi1> to vector<16x8xi32>
    %82 = arith.sitofp %81 : vector<16x8xi32> to vector<16x8xf32>
    %cst_31 = arith.constant dense<0.000000e+00> : vector<16x8xf32>
    %83 = tpu.matmul %61, %82, %cst_31 {dimension_numbers = #tpu.dot_dimension_numbers<[1], [0], [0], [1], [0, 0, 1, 1], [], []>} : vector<16x16xf32>, vector<16x8xf32>, vector<16x8xf32> -> vector<16x8xf32>
    %84 = vector.shape_cast %83 : vector<16x8xf32> to vector<2x8x8xf32>
    %c0_32 = arith.constant 0 : index
    %c0_33 = arith.constant 0 : index
    %c0_34 = arith.constant 0 : index
    %85 = vector.load %arg7[%c0_32, %c0_33, %c0_34] : memref<2x8x8xf32, #tpu.memory_space<vmem>>, vector<2x8x8xf32>
    tpu.vector_store %arg7[%c0_32, %c0_33, %c0_34], %84 {strides = array<i32>} : memref<2x8x8xf32, #tpu.memory_space<vmem>>, vector<2x8x8xf32>,
    return
  }
  func.func @transform_0(%arg0: i32) -> (i32, i32, i32) {
    %c0_i32 = arith.constant 0 : i32
    %c0_i32_0 = arith.constant 0 : i32
    %c0_i32_1 = arith.constant 0 : i32
    return %arg0, %c0_i32, %c0_i32_0 : i32, i32, i32
  }
  func.func @transform_1(%arg0: i32) -> (i32, i32) {
    %c0_i32 = arith.constant 0 : i32
    %c0_i32_0 = arith.constant 0 : i32
    %c0_i32_1 = arith.constant 0 : i32
    return %c0_i32, %c0_i32_0 : i32, i32
  }
  func.func @transform_2(%arg0: i32) -> (i32, i32) {
    %c0_i32 = arith.constant 0 : i32
    %c0_i32_0 = arith.constant 0 : i32
    %c0_i32_1 = arith.constant 0 : i32
    return %c0_i32, %c0_i32_0 : i32, i32
  }
  func.func @transform_3(%arg0: i32) -> (i32, i32) {
    %c0_i32 = arith.constant 0 : i32
    %c0_i32_0 = arith.constant 0 : i32
    %c0_i32_1 = arith.constant 0 : i32
    return %c0_i32, %c0_i32_0 : i32, i32
  }
  func.func @transform_4(%arg0: i32) -> (i32, i32) {
    %c0_i32 = arith.constant 0 : i32
    %c0_i32_0 = arith.constant 0 : i32
    %c0_i32_1 = arith.constant 0 : i32
    return %c0_i32, %c0_i32_0 : i32, i32
  }
  func.func @transform_5(%arg0: i32) -> (i32, i32) {
    %c0_i32 = arith.constant 0 : i32
    %c0_i32_0 = arith.constant 0 : i32
    return %arg0, %c0_i32 : i32, i32
  }
  func.func @transform_6(%arg0: i32) -> (i32, i32, i32) {
    %c0_i32 = arith.constant 0 : i32
    %c0_i32_0 = arith.constant 0 : i32
    %c0_i32_1 = arith.constant 0 : i32
    return %arg0, %c0_i32, %c0_i32_0 : i32, i32, i32
  }
}

module attributes {stable_mosaic.version = 11 : i64} {
  func.func @kernel(%arg0: i32, %arg1: memref<2x8x32xf32, #tpu.memory_space<vmem>>, %arg2: memref<1x32xf32, #tpu.memory_space<vmem>>, %arg3: memref<1x32xf32, #tpu.memory_space<vmem>>, %arg4: memref<32x96xf32, #tpu.memory_space<vmem>>, %arg5: memref<1x96xf32, #tpu.memory_space<vmem>>, %arg6: memref<2x32xf32, #tpu.memory_space<vmem>>, %arg7: memref<1x128xf32, #tpu.memory_space<vmem>>) attributes {dimension_semantics = [#tpu.dimension_semantics<parallel>], iteration_bounds = array<i64: 1>, scalar_prefetch = 0 : i64, scratch_operands = 0 : i64, tpu.core_type = #tpu.core_type<tc>, window_params = [{transform_indices = @transform_0, window_bounds = array<i64: 2, 8, 32>}, {pipeline_mode = #tpu.pipeline_mode<synchronous>, transform_indices = @transform_1, window_bounds = array<i64: 1, 32>}, {pipeline_mode = #tpu.pipeline_mode<synchronous>, transform_indices = @transform_2, window_bounds = array<i64: 1, 32>}, {pipeline_mode = #tpu.pipeline_mode<synchronous>, transform_indices = @transform_3, window_bounds = array<i64: 32, 96>}, {pipeline_mode = #tpu.pipeline_mode<synchronous>, transform_indices = @transform_4, window_bounds = array<i64: 1, 96>}, {transform_indices = @transform_5, window_bounds = array<i64: 2, 32>}, {transform_indices = @transform_6, window_bounds = array<i64: 1, 128>}]} {
    %c0 = arith.constant 0 : index
    %c0_0 = arith.constant 0 : index
    %c0_1 = arith.constant 0 : index
    %0 = vector.load %arg1[%c0, %c0_0, %c0_1] : memref<2x8x32xf32, #tpu.memory_space<vmem>>, vector<2x8x32xf32>
    %1 = vector.shape_cast %0 : vector<2x8x32xf32> to vector<16x32xf32>
    %cst = arith.constant dense<0.000000e+00> : vector<16xf32>
    %2 = vector.multi_reduction <add>, %1, %cst [1] : vector<16x32xf32> to vector<16xf32>
    %3 = vector.shape_cast %2 : vector<16xf32> to vector<16x1xf32>
    %cst_2 = arith.constant 3.200000e+01 : f32
    %4 = vector.broadcast %cst_2 : f32 to vector<16x1xf32>
    %5 = arith.divf %3, %4 : vector<16x1xf32>
    %6 = vector.broadcast %5 : vector<16x1xf32> to vector<16x32xf32>
    %7 = arith.subf %1, %6 : vector<16x32xf32>
    %8 = arith.mulf %7, %7 : vector<16x32xf32>
    %cst_3 = arith.constant dense<0.000000e+00> : vector<16xf32>
    %9 = vector.multi_reduction <add>, %8, %cst_3 [1] : vector<16x32xf32> to vector<16xf32>
    %10 = vector.shape_cast %9 : vector<16xf32> to vector<16x1xf32>
    %cst_4 = arith.constant 3.200000e+01 : f32
    %11 = vector.broadcast %cst_4 : f32 to vector<16x1xf32>
    %12 = arith.divf %10, %11 : vector<16x1xf32>
    %13 = vector.broadcast %5 : vector<16x1xf32> to vector<16x32xf32>
    %14 = arith.subf %1, %13 : vector<16x32xf32>
    %cst_5 = arith.constant 9.99999974E-6 : f32
    %15 = vector.broadcast %cst_5 : f32 to vector<16x1xf32>
    %16 = arith.addf %12, %15 : vector<16x1xf32>
    %17 = math.rsqrt %16 : vector<16x1xf32>
    %18 = vector.broadcast %17 : vector<16x1xf32> to vector<16x32xf32>
    %19 = arith.mulf %14, %18 : vector<16x32xf32>
    %c0_6 = arith.constant 0 : index
    %c0_7 = arith.constant 0 : index
    %20 = vector.load %arg2[%c0_6, %c0_7] : memref<1x32xf32, #tpu.memory_space<vmem>>, vector<1x32xf32>
    %21 = vector.broadcast %20 : vector<1x32xf32> to vector<16x32xf32>
    %22 = arith.mulf %19, %21 : vector<16x32xf32>
    %c0_8 = arith.constant 0 : index
    %c0_9 = arith.constant 0 : index
    %23 = vector.load %arg3[%c0_8, %c0_9] : memref<1x32xf32, #tpu.memory_space<vmem>>, vector<1x32xf32>
    %24 = vector.broadcast %23 : vector<1x32xf32> to vector<16x32xf32>
    %25 = arith.addf %22, %24 : vector<16x32xf32>
    %c0_10 = arith.constant 0 : index
    %c0_11 = arith.constant 0 : index
    %26 = vector.load %arg4[%c0_10, %c0_11] : memref<32x96xf32, #tpu.memory_space<vmem>>, vector<32x96xf32>
    %cst_12 = arith.constant dense<0.000000e+00> : vector<16x96xf32>
    %27 = tpu.matmul %25, %26, %cst_12 {dimension_numbers = #tpu.dot_dimension_numbers<[1], [0], [0], [1], [0, 0, 1, 1], [], []>} : vector<16x32xf32>, vector<32x96xf32>, vector<16x96xf32> -> vector<16x96xf32>
    %c0_13 = arith.constant 0 : index
    %c0_14 = arith.constant 0 : index
    %28 = vector.load %arg5[%c0_13, %c0_14] : memref<1x96xf32, #tpu.memory_space<vmem>>, vector<1x96xf32>
    %29 = vector.broadcast %28 : vector<1x96xf32> to vector<16x96xf32>
    %30 = arith.addf %27, %29 : vector<16x96xf32>
    %31 = vector.extract_strided_slice %30 {offsets = [0, 0], sizes = [16, 32], strides = [1, 1]} : vector<16x96xf32> to vector<16x32xf32>
    %32 = vector.extract_strided_slice %30 {offsets = [0, 32], sizes = [16, 32], strides = [1, 1]} : vector<16x96xf32> to vector<16x32xf32>
    %33 = vector.extract_strided_slice %30 {offsets = [0, 64], sizes = [16, 32], strides = [1, 1]} : vector<16x96xf32> to vector<16x32xf32>
    "tpu.trace_start"() <{level = 10 : i32, message = "qd,kd->qk"}> : () -> ()
    %cst_15 = arith.constant dense<0.000000e+00> : vector<16x16xf32>
    %34 = tpu.matmul %31, %32, %cst_15 {dimension_numbers = #tpu.dot_dimension_numbers<[1], [1], [0], [0], [0, 0, 1, 0], [], []>} : vector<16x32xf32>, vector<16x32xf32>, vector<16x16xf32> -> vector<16x16xf32>
    "tpu.trace_stop"() : () -> ()
    %35 = tpu.iota {dimensions = array<i32: 0>} : vector<16x16xi32>
    %36 = tpu.iota {dimensions = array<i32: 1>} : vector<16x16xi32>
    %37 = arith.sitofp %35 : vector<16x16xi32> to vector<16x16xf32>
    %cst_16 = arith.constant 5.000000e-01 : f32
    %38 = vector.broadcast %cst_16 : f32 to vector<16x16xf32>
    %39 = arith.addf %37, %38 : vector<16x16xf32>
    %cst_17 = arith.constant 1.250000e-01 : f32
    %40 = vector.broadcast %cst_17 : f32 to vector<16x16xf32>
    %41 = arith.mulf %39, %40 : vector<16x16xf32>
    %42 = math.floor %41 : vector<16x16xf32>
    %43 = arith.sitofp %36 : vector<16x16xi32> to vector<16x16xf32>
    %cst_18 = arith.constant 5.000000e-01 : f32
    %44 = vector.broadcast %cst_18 : f32 to vector<16x16xf32>
    %45 = arith.addf %43, %44 : vector<16x16xf32>
    %cst_19 = arith.constant 1.250000e-01 : f32
    %46 = vector.broadcast %cst_19 : f32 to vector<16x16xf32>
    %47 = arith.mulf %45, %46 : vector<16x16xf32>
    %48 = math.floor %47 : vector<16x16xf32>
    %49 = arith.cmpf oeq, %42, %48 : vector<16x16xf32>
    %cst_20 = arith.constant 0xFF800000 : f32
    %50 = vector.broadcast %cst_20 : f32 to vector<16x16xf32>
    %51 = arith.select %49, %34, %50 : vector<16x16xi1>, vector<16x16xf32>
    %cst_21 = arith.constant dense<0xFF800000> : vector<16xf32>
    %52 = vector.multi_reduction <maximumf>, %51, %cst_21 [1] : vector<16x16xf32> to vector<16xf32>
    %53 = vector.shape_cast %52 : vector<16xf32> to vector<16x1xf32>
    %54 = vector.broadcast %53 : vector<16x1xf32> to vector<16x16xf32>
    %55 = arith.subf %51, %54 : vector<16x16xf32>
    %56 = math.exp %55 : vector<16x16xf32>
    %cst_22 = arith.constant dense<0.000000e+00> : vector<16xf32>
    %57 = vector.multi_reduction <add>, %56, %cst_22 [1] : vector<16x16xf32> to vector<16xf32>
    %58 = vector.shape_cast %57 : vector<16xf32> to vector<16x1xf32>
    %59 = tpu.reciprocal %58 : vector<16x1xf32> -> vector<16x1xf32>
    %60 = vector.broadcast %59 : vector<16x1xf32> to vector<16x16xf32>
    %61 = arith.mulf %56, %60 : vector<16x16xf32>
    %cst_23 = arith.constant dense<0.000000e+00> : vector<16x32xf32>
    %62 = tpu.matmul %61, %33, %cst_23 {dimension_numbers = #tpu.dot_dimension_numbers<[1], [0], [0], [1], [0, 0, 1, 1], [], []>} : vector<16x16xf32>, vector<16x32xf32>, vector<16x32xf32> -> vector<16x32xf32>
    %63 = vector.shape_cast %62 : vector<16x32xf32> to vector<2x8x32xf32>
    %cst_24 = arith.constant dense<0.000000e+00> : vector<2x32xf32>
    %64 = vector.multi_reduction <add>, %63, %cst_24 [1] : vector<2x8x32xf32> to vector<2x32xf32>
    %cst_25 = arith.constant 8.000000e+00 : f32
    %65 = vector.broadcast %cst_25 : f32 to vector<2x32xf32>
    %66 = arith.divf %64, %65 : vector<2x32xf32>
    %c0_26 = arith.constant 0 : index
    %c0_27 = arith.constant 0 : index
    %67 = vector.load %arg6[%c0_26, %c0_27] : memref<2x32xf32, #tpu.memory_space<vmem>>, vector<2x32xf32>
    tpu.vector_store %arg6[%c0_26, %c0_27], %66 {strides = array<i32>} : memref<2x32xf32, #tpu.memory_space<vmem>>, vector<2x32xf32>,
    %68 = tpu.iota {dimensions = array<i32: 0>} : vector<16x8xi32>
    %69 = tpu.iota {dimensions = array<i32: 1>} : vector<16x8xi32>
    %70 = arith.sitofp %68 : vector<16x8xi32> to vector<16x8xf32>
    %cst_28 = arith.constant 5.000000e-01 : f32
    %71 = vector.broadcast %cst_28 : f32 to vector<16x8xf32>
    %72 = arith.addf %70, %71 : vector<16x8xf32>
    %cst_29 = arith.constant 1.250000e-01 : f32
    %73 = vector.broadcast %cst_29 : f32 to vector<16x8xf32>
    %74 = arith.mulf %72, %73 : vector<16x8xf32>
    %75 = math.floor %74 : vector<16x8xf32>
    %cst_30 = arith.constant 8.000000e+00 : f32
    %76 = vector.broadcast %cst_30 : f32 to vector<16x8xf32>
    %77 = arith.mulf %76, %75 : vector<16x8xf32>
    %78 = arith.subf %70, %77 : vector<16x8xf32>
    %79 = arith.sitofp %69 : vector<16x8xi32> to vector<16x8xf32>
    %80 = arith.cmpf oeq, %78, %79 : vector<16x8xf32>
    %81 = arith.extui %80 : vector<16x8xi1> to vector<16x8xi32>
    %82 = arith.sitofp %81 : vector<16x8xi32> to vector<16x8xf32>
    %cst_31 = arith.constant dense<0.000000e+00> : vector<16x8xf32>
    %83 = tpu.matmul %61, %82, %cst_31 {dimension_numbers = #tpu.dot_dimension_numbers<[1], [0], [0], [1], [0, 0, 1, 1], [], []>} : vector<16x16xf32>, vector<16x8xf32>, vector<16x8xf32> -> vector<16x8xf32>
    %84 = vector.shape_cast %83 : vector<16x8xf32> to vector<1x128xf32>
    %c0_32 = arith.constant 0 : index
    %c0_33 = arith.constant 0 : index
    %85 = vector.load %arg7[%c0_32, %c0_33] : memref<1x128xf32, #tpu.memory_space<vmem>>, vector<1x128xf32>
    tpu.vector_store %arg7[%c0_32, %c0_33], %84 {strides = array<i32>} : memref<1x128xf32, #tpu.memory_space<vmem>>, vector<1x128xf32>,
    return
  }
  func.func @transform_0(%arg0: i32) -> (i32, i32, i32) {
    %c0_i32 = arith.constant 0 : i32
    %c0_i32_0 = arith.constant 0 : i32
    %c0_i32_1 = arith.constant 0 : i32
    return %arg0, %c0_i32, %c0_i32_0 : i32, i32, i32
  }
  func.func @transform_1(%arg0: i32) -> (i32, i32) {
    %c0_i32 = arith.constant 0 : i32
    %c0_i32_0 = arith.constant 0 : i32
    %c0_i32_1 = arith.constant 0 : i32
    return %c0_i32, %c0_i32_0 : i32, i32
  }
  func.func @transform_2(%arg0: i32) -> (i32, i32) {
    %c0_i32 = arith.constant 0 : i32
    %c0_i32_0 = arith.constant 0 : i32
    %c0_i32_1 = arith.constant 0 : i32
    return %c0_i32, %c0_i32_0 : i32, i32
  }
  func.func @transform_3(%arg0: i32) -> (i32, i32) {
    %c0_i32 = arith.constant 0 : i32
    %c0_i32_0 = arith.constant 0 : i32
    %c0_i32_1 = arith.constant 0 : i32
    return %c0_i32, %c0_i32_0 : i32, i32
  }
  func.func @transform_4(%arg0: i32) -> (i32, i32) {
    %c0_i32 = arith.constant 0 : i32
    %c0_i32_0 = arith.constant 0 : i32
    %c0_i32_1 = arith.constant 0 : i32
    return %c0_i32, %c0_i32_0 : i32, i32
  }
  func.func @transform_5(%arg0: i32) -> (i32, i32) {
    %c0_i32 = arith.constant 0 : i32
    %c0_i32_0 = arith.constant 0 : i32
    return %arg0, %c0_i32 : i32, i32
  }
  func.func @transform_6(%arg0: i32) -> (i32, i32) {
    %c0_i32 = arith.constant 0 : i32
    %c0_i32_0 = arith.constant 0 : i32
    return %arg0, %c0_i32 : i32, i32
  }
}

module attributes {stable_mosaic.version = 11 : i64} {
  func.func @kernel(%arg0: i32, %arg1: memref<2x8x32xf32, #tpu.memory_space<vmem>>, %arg2: memref<1x32xf32, #tpu.memory_space<vmem>>, %arg3: memref<1x32xf32, #tpu.memory_space<vmem>>, %arg4: memref<32x96xf32, #tpu.memory_space<vmem>>, %arg5: memref<1x96xf32, #tpu.memory_space<vmem>>, %arg6: memref<2x32xf32, #tpu.memory_space<vmem>>, %arg7: memref<2x8x8xf32, #tpu.memory_space<vmem>>) attributes {dimension_semantics = [#tpu.dimension_semantics<parallel>], iteration_bounds = array<i64: 1>, scalar_prefetch = 0 : i64, scratch_operands = 0 : i64, tpu.core_type = #tpu.core_type<tc>, window_params = [{transform_indices = @transform_0, window_bounds = array<i64: 2, 8, 32>}, {pipeline_mode = #tpu.pipeline_mode<synchronous>, transform_indices = @transform_1, window_bounds = array<i64: 1, 32>}, {pipeline_mode = #tpu.pipeline_mode<synchronous>, transform_indices = @transform_2, window_bounds = array<i64: 1, 32>}, {pipeline_mode = #tpu.pipeline_mode<synchronous>, transform_indices = @transform_3, window_bounds = array<i64: 32, 96>}, {pipeline_mode = #tpu.pipeline_mode<synchronous>, transform_indices = @transform_4, window_bounds = array<i64: 1, 96>}, {transform_indices = @transform_5, window_bounds = array<i64: 2, 32>}, {transform_indices = @transform_6, window_bounds = array<i64: 2, 8, 8>}]} {
    %c0 = arith.constant 0 : index
    %c0_0 = arith.constant 0 : index
    %c0_1 = arith.constant 0 : index
    %0 = vector.load %arg1[%c0, %c0_0, %c0_1] : memref<2x8x32xf32, #tpu.memory_space<vmem>>, vector<2x8x32xf32>
    %1 = vector.shape_cast %0 : vector<2x8x32xf32> to vector<16x32xf32>
    %cst = arith.constant dense<0.000000e+00> : vector<16xf32>
    %2 = vector.multi_reduction <add>, %1, %cst [1] : vector<16x32xf32> to vector<16xf32>
    %3 = vector.shape_cast %2 : vector<16xf32> to vector<16x1xf32>
    %cst_2 = arith.constant 3.200000e+01 : f32
    %4 = vector.broadcast %cst_2 : f32 to vector<16x1xf32>
    %5 = arith.divf %3, %4 : vector<16x1xf32>
    %6 = vector.broadcast %5 : vector<16x1xf32> to vector<16x32xf32>
    %7 = arith.subf %1, %6 : vector<16x32xf32>
    %8 = arith.mulf %7, %7 : vector<16x32xf32>
    %cst_3 = arith.constant dense<0.000000e+00> : vector<16xf32>
    %9 = vector.multi_reduction <add>, %8, %cst_3 [1] : vector<16x32xf32> to vector<16xf32>
    %10 = vector.shape_cast %9 : vector<16xf32> to vector<16x1xf32>
    %cst_4 = arith.constant 3.200000e+01 : f32
    %11 = vector.broadcast %cst_4 : f32 to vector<16x1xf32>
    %12 = arith.divf %10, %11 : vector<16x1xf32>
    %13 = vector.broadcast %5 : vector<16x1xf32> to vector<16x32xf32>
    %14 = arith.subf %1, %13 : vector<16x32xf32>
    %cst_5 = arith.constant 9.99999974E-6 : f32
    %15 = vector.broadcast %cst_5 : f32 to vector<16x1xf32>
    %16 = arith.addf %12, %15 : vector<16x1xf32>
    %17 = math.rsqrt %16 : vector<16x1xf32>
    %18 = vector.broadcast %17 : vector<16x1xf32> to vector<16x32xf32>
    %19 = arith.mulf %14, %18 : vector<16x32xf32>
    %c0_6 = arith.constant 0 : index
    %c0_7 = arith.constant 0 : index
    %20 = vector.load %arg2[%c0_6, %c0_7] : memref<1x32xf32, #tpu.memory_space<vmem>>, vector<1x32xf32>
    %21 = vector.broadcast %20 : vector<1x32xf32> to vector<16x32xf32>
    %22 = arith.mulf %19, %21 : vector<16x32xf32>
    %c0_8 = arith.constant 0 : index
    %c0_9 = arith.constant 0 : index
    %23 = vector.load %arg3[%c0_8, %c0_9] : memref<1x32xf32, #tpu.memory_space<vmem>>, vector<1x32xf32>
    %24 = vector.broadcast %23 : vector<1x32xf32> to vector<16x32xf32>
    %25 = arith.addf %22, %24 : vector<16x32xf32>
    %c0_10 = arith.constant 0 : index
    %c0_11 = arith.constant 0 : index
    %26 = vector.load %arg4[%c0_10, %c0_11] : memref<32x96xf32, #tpu.memory_space<vmem>>, vector<32x96xf32>
    %cst_12 = arith.constant dense<0.000000e+00> : vector<16x96xf32>
    %27 = tpu.matmul %25, %26, %cst_12 {dimension_numbers = #tpu.dot_dimension_numbers<[1], [0], [0], [1], [0, 0, 1, 1], [], []>} : vector<16x32xf32>, vector<32x96xf32>, vector<16x96xf32> -> vector<16x96xf32>
    %c0_13 = arith.constant 0 : index
    %c0_14 = arith.constant 0 : index
    %28 = vector.load %arg5[%c0_13, %c0_14] : memref<1x96xf32, #tpu.memory_space<vmem>>, vector<1x96xf32>
    %29 = vector.broadcast %28 : vector<1x96xf32> to vector<16x96xf32>
    %30 = arith.addf %27, %29 : vector<16x96xf32>
    %31 = vector.extract_strided_slice %30 {offsets = [0, 0], sizes = [16, 32], strides = [1, 1]} : vector<16x96xf32> to vector<16x32xf32>
    %32 = vector.extract_strided_slice %30 {offsets = [0, 32], sizes = [16, 32], strides = [1, 1]} : vector<16x96xf32> to vector<16x32xf32>
    %33 = vector.extract_strided_slice %30 {offsets = [0, 64], sizes = [16, 32], strides = [1, 1]} : vector<16x96xf32> to vector<16x32xf32>
    "tpu.trace_start"() <{level = 10 : i32, message = "qd,kd->qk"}> : () -> ()
    %cst_15 = arith.constant dense<0.000000e+00> : vector<16x16xf32>
    %34 = tpu.matmul %31, %32, %cst_15 {dimension_numbers = #tpu.dot_dimension_numbers<[1], [1], [0], [0], [0, 0, 1, 0], [], []>} : vector<16x32xf32>, vector<16x32xf32>, vector<16x16xf32> -> vector<16x16xf32>
    "tpu.trace_stop"() : () -> ()
    %35 = tpu.iota {dimensions = array<i32: 0>} : vector<16x16xi32>
    %36 = tpu.iota {dimensions = array<i32: 1>} : vector<16x16xi32>
    %37 = arith.sitofp %35 : vector<16x16xi32> to vector<16x16xf32>
    %cst_16 = arith.constant 5.000000e-01 : f32
    %38 = vector.broadcast %cst_16 : f32 to vector<16x16xf32>
    %39 = arith.addf %37, %38 : vector<16x16xf32>
    %cst_17 = arith.constant 1.250000e-01 : f32
    %40 = vector.broadcast %cst_17 : f32 to vector<16x16xf32>
    %41 = arith.mulf %39, %40 : vector<16x16xf32>
    %42 = math.floor %41 : vector<16x16xf32>
    %43 = arith.sitofp %36 : vector<16x16xi32> to vector<16x16xf32>
    %cst_18 = arith.constant 5.000000e-01 : f32
    %44 = vector.broadcast %cst_18 : f32 to vector<16x16xf32>
    %45 = arith.addf %43, %44 : vector<16x16xf32>
    %cst_19 = arith.constant 1.250000e-01 : f32
    %46 = vector.broadcast %cst_19 : f32 to vector<16x16xf32>
    %47 = arith.mulf %45, %46 : vector<16x16xf32>
    %48 = math.floor %47 : vector<16x16xf32>
    %49 = arith.cmpf oeq, %42, %48 : vector<16x16xf32>
    %cst_20 = arith.constant 0xFF800000 : f32
    %50 = vector.broadcast %cst_20 : f32 to vector<16x16xf32>
    %51 = arith.select %49, %34, %50 : vector<16x16xi1>, vector<16x16xf32>
    %cst_21 = arith.constant dense<0xFF800000> : vector<16xf32>
    %52 = vector.multi_reduction <maximumf>, %51, %cst_21 [1] : vector<16x16xf32> to vector<16xf32>
    %53 = vector.shape_cast %52 : vector<16xf32> to vector<16x1xf32>
    %54 = vector.broadcast %53 : vector<16x1xf32> to vector<16x16xf32>
    %55 = arith.subf %51, %54 : vector<16x16xf32>
    %56 = math.exp %55 : vector<16x16xf32>
    %cst_22 = arith.constant dense<0.000000e+00> : vector<16xf32>
    %57 = vector.multi_reduction <add>, %56, %cst_22 [1] : vector<16x16xf32> to vector<16xf32>
    %58 = vector.shape_cast %57 : vector<16xf32> to vector<16x1xf32>
    %59 = tpu.reciprocal %58 : vector<16x1xf32> -> vector<16x1xf32>
    %60 = vector.broadcast %59 : vector<16x1xf32> to vector<16x16xf32>
    %61 = arith.mulf %56, %60 : vector<16x16xf32>
    %cst_23 = arith.constant dense<0.000000e+00> : vector<16x32xf32>
    %62 = tpu.matmul %61, %33, %cst_23 {dimension_numbers = #tpu.dot_dimension_numbers<[1], [0], [0], [1], [0, 0, 1, 1], [], []>} : vector<16x16xf32>, vector<16x32xf32>, vector<16x32xf32> -> vector<16x32xf32>
    %63 = vector.shape_cast %62 : vector<16x32xf32> to vector<2x8x32xf32>
    %cst_24 = arith.constant dense<0.000000e+00> : vector<2x32xf32>
    %64 = vector.multi_reduction <add>, %63, %cst_24 [1] : vector<2x8x32xf32> to vector<2x32xf32>
    %cst_25 = arith.constant 8.000000e+00 : f32
    %65 = vector.broadcast %cst_25 : f32 to vector<2x32xf32>
    %66 = arith.divf %64, %65 : vector<2x32xf32>
    %c0_26 = arith.constant 0 : index
    %c0_27 = arith.constant 0 : index
    %67 = vector.load %arg6[%c0_26, %c0_27] : memref<2x32xf32, #tpu.memory_space<vmem>>, vector<2x32xf32>
    tpu.vector_store %arg6[%c0_26, %c0_27], %66 {strides = array<i32>} : memref<2x32xf32, #tpu.memory_space<vmem>>, vector<2x32xf32>,
    %68 = tpu.iota {dimensions = array<i32: 0>} : vector<16x8xi32>
    %69 = tpu.iota {dimensions = array<i32: 1>} : vector<16x8xi32>
    %70 = arith.sitofp %68 : vector<16x8xi32> to vector<16x8xf32>
    %cst_28 = arith.constant 5.000000e-01 : f32
    %71 = vector.broadcast %cst_28 : f32 to vector<16x8xf32>
    %72 = arith.addf %70, %71 : vector<16x8xf32>
    %cst_29 = arith.constant 1.250000e-01 : f32
    %73 = vector.broadcast %cst_29 : f32 to vector<16x8xf32>
    %74 = arith.mulf %72, %73 : vector<16x8xf32>
    %75 = math.floor %74 : vector<16x8xf32>
    %cst_30 = arith.constant 8.000000e+00 : f32
    %76 = vector.broadcast %cst_30 : f32 to vector<16x8xf32>
    %77 = arith.mulf %76, %75 : vector<16x8xf32>
    %78 = arith.subf %70, %77 : vector<16x8xf32>
    %79 = arith.sitofp %69 : vector<16x8xi32> to vector<16x8xf32>
    %80 = arith.cmpf oeq, %78, %79 : vector<16x8xf32>
    %81 = arith.extui %80 : vector<16x8xi1> to vector<16x8xi32>
    %82 = arith.sitofp %81 : vector<16x8xi32> to vector<16x8xf32>
    %cst_31 = arith.constant dense<0.000000e+00> : vector<16x8xf32>
    %83 = tpu.matmul %61, %82, %cst_31 {dimension_numbers = #tpu.dot_dimension_numbers<[1], [0], [0], [1], [0, 0, 1, 1], [], []>} : vector<16x16xf32>, vector<16x8xf32>, vector<16x8xf32> -> vector<16x8xf32>
    %84 = vector.shape_cast %83 : vector<16x8xf32> to vector<2x8x8xf32>
    %c0_32 = arith.constant 0 : index
    %c0_33 = arith.constant 0 : index
    %c0_34 = arith.constant 0 : index
    %85 = vector.load %arg7[%c0_32, %c0_33, %c0_34] : memref<2x8x8xf32, #tpu.memory_space<vmem>>, vector<2x8x8xf32>
    tpu.vector_store %arg7[%c0_32, %c0_33, %c0_34], %84 {strides = array<i32>} : memref<2x8x8xf32, #tpu.memory_space<vmem>>, vector<2x8x8xf32>,
    return
  }
  func.func @transform_0(%arg0: i32) -> (i32, i32, i32) {
    %c0_i32 = arith.constant 0 : i32
    %c0_i32_0 = arith.constant 0 : i32
    %c0_i32_1 = arith.constant 0 : i32
    return %arg0, %c0_i32, %c0_i32_0 : i32, i32, i32
  }
  func.func @transform_1(%arg0: i32) -> (i32, i32) {
    %c0_i32 = arith.constant 0 : i32
    %c0_i32_0 = arith.constant 0 : i32
    %c0_i32_1 = arith.constant 0 : i32
    return %c0_i32, %c0_i32_0 : i32, i32
  }
  func.func @transform_2(%arg0: i32) -> (i32, i32) {
    %c0_i32 = arith.constant 0 : i32
    %c0_i32_0 = arith.constant 0 : i32
    %c0_i32_1 = arith.constant 0 : i32
    return %c0_i32, %c0_i32_0 : i32, i32
  }
  func.func @transform_3(%arg0: i32) -> (i32, i32) {
    %c0_i32 = arith.constant 0 : i32
    %c0_i32_0 = arith.constant 0 : i32
    %c0_i32_1 = arith.constant 0 : i32
    return %c0_i32, %c0_i32_0 : i32, i32
  }
  func.func @transform_4(%arg0: i32) -> (i32, i32) {
    %c0_i32 = arith.constant 0 : i32
    %c0_i32_0 = arith.constant 0 : i32
    %c0_i32_1 = arith.constant 0 : i32
    return %c0_i32, %c0_i32_0 : i32, i32
  }
  func.func @transform_5(%arg0: i32) -> (i32, i32) {
    %c0_i32 = arith.constant 0 : i32
    %c0_i32_0 = arith.constant 0 : i32
    return %arg0, %c0_i32 : i32, i32
  }
  func.func @transform_6(%arg0: i32) -> (i32, i32, i32) {
    %c0_i32 = arith.constant 0 : i32
    %c0_i32_0 = arith.constant 0 : i32
    %c0_i32_1 = arith.constant 0 : i32
    return %arg0, %c0_i32, %c0_i32_0 : i32, i32, i32
  }
}

module attributes {stable_mosaic.version = 11 : i64} {
  func.func @kernel(%arg0: i32, %arg1: memref<2x8x32xf32, #tpu.memory_space<vmem>>, %arg2: memref<1x32xf32, #tpu.memory_space<vmem>>, %arg3: memref<1x32xf32, #tpu.memory_space<vmem>>, %arg4: memref<32x96xf32, #tpu.memory_space<vmem>>, %arg5: memref<1x96xf32, #tpu.memory_space<vmem>>, %arg6: memref<2x32xf32, #tpu.memory_space<vmem>>, %arg7: memref<2x8x8xf32, #tpu.memory_space<vmem>>) attributes {dimension_semantics = [#tpu.dimension_semantics<parallel>], iteration_bounds = array<i64: 1>, scalar_prefetch = 0 : i64, scratch_operands = 0 : i64, tpu.core_type = #tpu.core_type<tc>, window_params = [{transform_indices = @transform_0, window_bounds = array<i64: 2, 8, 32>}, {pipeline_mode = #tpu.pipeline_mode<synchronous>, transform_indices = @transform_1, window_bounds = array<i64: 1, 32>}, {pipeline_mode = #tpu.pipeline_mode<synchronous>, transform_indices = @transform_2, window_bounds = array<i64: 1, 32>}, {pipeline_mode = #tpu.pipeline_mode<synchronous>, transform_indices = @transform_3, window_bounds = array<i64: 32, 96>}, {pipeline_mode = #tpu.pipeline_mode<synchronous>, transform_indices = @transform_4, window_bounds = array<i64: 1, 96>}, {transform_indices = @transform_5, window_bounds = array<i64: 2, 32>}, {transform_indices = @transform_6, window_bounds = array<i64: 2, 8, 8>}]} {
    %c0 = arith.constant 0 : index
    %c0_0 = arith.constant 0 : index
    %c0_1 = arith.constant 0 : index
    %0 = vector.load %arg1[%c0, %c0_0, %c0_1] : memref<2x8x32xf32, #tpu.memory_space<vmem>>, vector<2x8x32xf32>
    %1 = vector.shape_cast %0 : vector<2x8x32xf32> to vector<16x32xf32>
    %cst = arith.constant dense<0.000000e+00> : vector<16xf32>
    %2 = vector.multi_reduction <add>, %1, %cst [1] : vector<16x32xf32> to vector<16xf32>
    %3 = vector.shape_cast %2 : vector<16xf32> to vector<16x1xf32>
    %cst_2 = arith.constant 3.200000e+01 : f32
    %4 = vector.broadcast %cst_2 : f32 to vector<16x1xf32>
    %5 = arith.divf %3, %4 : vector<16x1xf32>
    %6 = vector.broadcast %5 : vector<16x1xf32> to vector<16x32xf32>
    %7 = arith.subf %1, %6 : vector<16x32xf32>
    %8 = arith.mulf %7, %7 : vector<16x32xf32>
    %cst_3 = arith.constant dense<0.000000e+00> : vector<16xf32>
    %9 = vector.multi_reduction <add>, %8, %cst_3 [1] : vector<16x32xf32> to vector<16xf32>
    %10 = vector.shape_cast %9 : vector<16xf32> to vector<16x1xf32>
    %cst_4 = arith.constant 3.200000e+01 : f32
    %11 = vector.broadcast %cst_4 : f32 to vector<16x1xf32>
    %12 = arith.divf %10, %11 : vector<16x1xf32>
    %13 = vector.broadcast %5 : vector<16x1xf32> to vector<16x32xf32>
    %14 = arith.subf %1, %13 : vector<16x32xf32>
    %cst_5 = arith.constant 9.99999974E-6 : f32
    %15 = vector.broadcast %cst_5 : f32 to vector<16x1xf32>
    %16 = arith.addf %12, %15 : vector<16x1xf32>
    %17 = math.rsqrt %16 : vector<16x1xf32>
    %18 = vector.broadcast %17 : vector<16x1xf32> to vector<16x32xf32>
    %19 = arith.mulf %14, %18 : vector<16x32xf32>
    %c0_6 = arith.constant 0 : index
    %c0_7 = arith.constant 0 : index
    %20 = vector.load %arg2[%c0_6, %c0_7] : memref<1x32xf32, #tpu.memory_space<vmem>>, vector<1x32xf32>
    %21 = vector.broadcast %20 : vector<1x32xf32> to vector<16x32xf32>
    %22 = arith.mulf %19, %21 : vector<16x32xf32>
    %c0_8 = arith.constant 0 : index
    %c0_9 = arith.constant 0 : index
    %23 = vector.load %arg3[%c0_8, %c0_9] : memref<1x32xf32, #tpu.memory_space<vmem>>, vector<1x32xf32>
    %24 = vector.broadcast %23 : vector<1x32xf32> to vector<16x32xf32>
    %25 = arith.addf %22, %24 : vector<16x32xf32>
    %c0_10 = arith.constant 0 : index
    %c0_11 = arith.constant 0 : index
    %26 = vector.load %arg4[%c0_10, %c0_11] : memref<32x96xf32, #tpu.memory_space<vmem>>, vector<32x96xf32>
    %cst_12 = arith.constant dense<0.000000e+00> : vector<16x96xf32>
    %27 = tpu.matmul %25, %26, %cst_12 {dimension_numbers = #tpu.dot_dimension_numbers<[1], [0], [0], [1], [0, 0, 1, 1], [], []>} : vector<16x32xf32>, vector<32x96xf32>, vector<16x96xf32> -> vector<16x96xf32>
    %c0_13 = arith.constant 0 : index
    %c0_14 = arith.constant 0 : index
    %28 = vector.load %arg5[%c0_13, %c0_14] : memref<1x96xf32, #tpu.memory_space<vmem>>, vector<1x96xf32>
    %29 = vector.broadcast %28 : vector<1x96xf32> to vector<16x96xf32>
    %30 = arith.addf %27, %29 : vector<16x96xf32>
    %31 = vector.extract_strided_slice %30 {offsets = [0, 0], sizes = [16, 32], strides = [1, 1]} : vector<16x96xf32> to vector<16x32xf32>
    %32 = vector.extract_strided_slice %30 {offsets = [0, 32], sizes = [16, 32], strides = [1, 1]} : vector<16x96xf32> to vector<16x32xf32>
    %33 = vector.extract_strided_slice %30 {offsets = [0, 64], sizes = [16, 32], strides = [1, 1]} : vector<16x96xf32> to vector<16x32xf32>
    %34 = vector.shape_cast %31 : vector<16x32xf32> to vector<2x8x32xf32>
    %35 = vector.shape_cast %32 : vector<16x32xf32> to vector<2x8x32xf32>
    %36 = vector.shape_cast %33 : vector<16x32xf32> to vector<2x8x32xf32>
    "tpu.trace_start"() <{level = 10 : i32, message = "bqd,bkd->bqk"}> : () -> ()
    %cst_15 = arith.constant dense<0.000000e+00> : vector<2x8x8xf32>
    %37 = tpu.matmul %34, %35, %cst_15 {dimension_numbers = #tpu.dot_dimension_numbers<[2], [2], [1], [1], [0, 0, 0, 1, 1, 1], [0], [0]>} : vector<2x8x32xf32>, vector<2x8x32xf32>, vector<2x8x8xf32> -> vector<2x8x8xf32>
    "tpu.trace_stop"() : () -> ()
    %cst_16 = arith.constant dense<0xFF800000> : vector<2x8xf32>
    %38 = vector.multi_reduction <maximumf>, %37, %cst_16 [2] : vector<2x8x8xf32> to vector<2x8xf32>
    %39 = vector.shape_cast %38 : vector<2x8xf32> to vector<2x8x1xf32>
    %40 = vector.broadcast %39 : vector<2x8x1xf32> to vector<2x8x8xf32>
    %41 = arith.subf %37, %40 : vector<2x8x8xf32>
    %42 = math.exp %41 : vector<2x8x8xf32>
    %cst_17 = arith.constant dense<0.000000e+00> : vector<2x8xf32>
    %43 = vector.multi_reduction <add>, %42, %cst_17 [2] : vector<2x8x8xf32> to vector<2x8xf32>
    %44 = vector.shape_cast %43 : vector<2x8xf32> to vector<2x8x1xf32>
    %45 = tpu.reciprocal %44 : vector<2x8x1xf32> -> vector<2x8x1xf32>
    %46 = vector.broadcast %45 : vector<2x8x1xf32> to vector<2x8x8xf32>
    %47 = arith.mulf %42, %46 : vector<2x8x8xf32>
    "tpu.trace_start"() <{level = 10 : i32, message = "bqk,bkd->bqd"}> : () -> ()
    %cst_18 = arith.constant dense<0.000000e+00> : vector<2x8x32xf32>
    %48 = tpu.matmul %47, %36, %cst_18 {dimension_numbers = #tpu.dot_dimension_numbers<[2], [1], [1], [2], [0, 0, 0, 1, 1, 2], [0], [0]>} : vector<2x8x8xf32>, vector<2x8x32xf32>, vector<2x8x32xf32> -> vector<2x8x32xf32>
    "tpu.trace_stop"() : () -> ()
    %cst_19 = arith.constant dense<0.000000e+00> : vector<2x32xf32>
    %49 = vector.multi_reduction <add>, %48, %cst_19 [1] : vector<2x8x32xf32> to vector<2x32xf32>
    %cst_20 = arith.constant 8.000000e+00 : f32
    %50 = vector.broadcast %cst_20 : f32 to vector<2x32xf32>
    %51 = arith.divf %49, %50 : vector<2x32xf32>
    %c0_21 = arith.constant 0 : index
    %c0_22 = arith.constant 0 : index
    %52 = vector.load %arg6[%c0_21, %c0_22] : memref<2x32xf32, #tpu.memory_space<vmem>>, vector<2x32xf32>
    tpu.vector_store %arg6[%c0_21, %c0_22], %51 {strides = array<i32>} : memref<2x32xf32, #tpu.memory_space<vmem>>, vector<2x32xf32>,
    %c0_23 = arith.constant 0 : index
    %c0_24 = arith.constant 0 : index
    %c0_25 = arith.constant 0 : index
    %53 = vector.load %arg7[%c0_23, %c0_24, %c0_25] : memref<2x8x8xf32, #tpu.memory_space<vmem>>, vector<2x8x8xf32>
    tpu.vector_store %arg7[%c0_23, %c0_24, %c0_25], %47 {strides = array<i32>} : memref<2x8x8xf32, #tpu.memory_space<vmem>>, vector<2x8x8xf32>,
    return
  }
  func.func @transform_0(%arg0: i32) -> (i32, i32, i32) {
    %c0_i32 = arith.constant 0 : i32
    %c0_i32_0 = arith.constant 0 : i32
    %c0_i32_1 = arith.constant 0 : i32
    return %arg0, %c0_i32, %c0_i32_0 : i32, i32, i32
  }
  func.func @transform_1(%arg0: i32) -> (i32, i32) {
    %c0_i32 = arith.constant 0 : i32
    %c0_i32_0 = arith.constant 0 : i32
    %c0_i32_1 = arith.constant 0 : i32
    return %c0_i32, %c0_i32_0 : i32, i32
  }
  func.func @transform_2(%arg0: i32) -> (i32, i32) {
    %c0_i32 = arith.constant 0 : i32
    %c0_i32_0 = arith.constant 0 : i32
    %c0_i32_1 = arith.constant 0 : i32
    return %c0_i32, %c0_i32_0 : i32, i32
  }
  func.func @transform_3(%arg0: i32) -> (i32, i32) {
    %c0_i32 = arith.constant 0 : i32
    %c0_i32_0 = arith.constant 0 : i32
    %c0_i32_1 = arith.constant 0 : i32
    return %c0_i32, %c0_i32_0 : i32, i32
  }
  func.func @transform_4(%arg0: i32) -> (i32, i32) {
    %c0_i32 = arith.constant 0 : i32
    %c0_i32_0 = arith.constant 0 : i32
    %c0_i32_1 = arith.constant 0 : i32
    return %c0_i32, %c0_i32_0 : i32, i32
  }
  func.func @transform_5(%arg0: i32) -> (i32, i32) {
    %c0_i32 = arith.constant 0 : i32
    %c0_i32_0 = arith.constant 0 : i32
    return %arg0, %c0_i32 : i32, i32
  }
  func.func @transform_6(%arg0: i32) -> (i32, i32, i32) {
    %c0_i32 = arith.constant 0 : i32
    %c0_i32_0 = arith.constant 0 : i32
    %c0_i32_1 = arith.constant 0 : i32
    return %arg0, %c0_i32, %c0_i32_0 : i32, i32, i32
  }
}

</mosaic_0001>

<llo_original>
// kernel: tpu_custom_call.1
$region0: #{tpu_custom_call.1}
  #allocation0 [shape = 'u32[]', space=smem, size = 0x4, offset = 0x4, fixed_abs, tag = 'smem constant byte address 0x4 - core index']
  #allocation1 [shape = 'u32[144,128]{1,0:T(1,128)}', space=vmem, size = 0x12000, scoped, tag = 'internal scratch']
  %s0 = inlined_call_operand.hbm [shape: f32[2,8,32], index: 0, kind: input, shape index: {}]
  %s1 = inlined_call_operand.vmem [shape: f32[1,32], index: 1, kind: input, shape index: {}]
  %s2 = inlined_call_operand.vmem [shape: f32[1,32], index: 2, kind: input, shape index: {}]
  %s3 = inlined_call_operand.hbm [shape: f32[32,96], index: 3, kind: input, shape index: {}]
  %s4 = inlined_call_operand.vmem [shape: f32[1,96], index: 4, kind: input, shape index: {}]
  %s5 = inlined_call_operand.hbm [shape: f32[2,32], index: 5, kind: output, shape index: {0}]
  %s6 = inlined_call_operand.hbm [shape: f32[2,8,8], index: 6, kind: output, shape index: {1}]
  %7 = xla_tuple %s5, %s6
  %s8 = sld [smem:[#allocation0]]
  $region46: #{tpu_custom_call.1} parent=0
    _
  %s10 = ssub.s32 1, %s8
  %s11 = scalar_select 0, %s10, %s8
  $region1: #{tpu_custom_call.1} parent=0
    #allocation2 [shape = 'u8[8192]{0}', space=vmem, size = 0x2000, scoped, tag = 'input window, operand 0, single buffered']
    #allocation3 [shape = 's32[1]{0}', space=sflag, size = 0x4, scoped, tag = 'scoped memory for tpu_custom_call.1']
    #allocation4 [shape = 's32[1]{0}', space=sflag, size = 0x4, scoped, tag = 'scoped memory for tpu_custom_call.1']
    #allocation5 [shape = 'u8[16384]{0}', space=vmem, size = 0x4000, scoped, tag = 'input window, operand 3, single buffered']
    #allocation6 [shape = 's32[1]{0}', space=sflag, size = 0x4, scoped, tag = 'scoped memory for tpu_custom_call.1']
    #allocation7 [shape = 'u8[1024]{0}', space=vmem, size = 0x400, scoped, tag = 'output window, operand 0, single buffered']
    #allocation8 [shape = 'u8[8192]{0}', space=vmem, size = 0x2000, scoped, tag = 'output window, operand 1, single buffered']
    #allocation9 [shape = 's32[1]{0}', space=sflag, size = 0x4, scoped, tag = 'scoped memory for tpu_custom_call.1']
    %12 = vsyncpa [#allocation3], 0
    %13 = vsyncpa [#allocation6], 0
    %14 = vsyncpa [#allocation4], 0
    %15 = vsyncpa [#allocation9], 0
    // Predicated region
    $region2: #{tpu_custom_call.1} parent=1 // pred_check
      _
    $region3: #{tpu_custom_call.1} parent=1 // pred_check_branch
      %17 = sbr.rel (0) target = $region5
    $region4: #{tpu_custom_call.1} parent=1 // pred_region
      %s19 = ssub.s32 256, 256
      %20 = vsyncadd [#allocation3], %s19
      %s21 = sshll.u32 [#allocation2], 4
      %s22 = int_to_ptr.vmem [resolvable:$true] %s21
      %27 = dma.hbm_to_vmem [thread:$0]  %s0, 256, %s22, [#allocation3], 128, 128, 8
    $region5: #{tpu_custom_call.1} parent=1 // pred_fallthru
      _
    // Predicated region
    $region6: #{tpu_custom_call.1} parent=1 // pred_check
      _
    $region7: #{tpu_custom_call.1} parent=1 // pred_check_branch
      %29 = sbr.rel (0) target = $region9
    $region8: #{tpu_custom_call.1} parent=1 // pred_region
      _
    $region9: #{tpu_custom_call.1} parent=1 // pred_fallthru
      _
    // Predicated region
    $region10: #{tpu_custom_call.1} parent=1 // pred_check
      _
    $region11: #{tpu_custom_call.1} parent=1 // pred_check_branch
      %31 = sbr.rel (0) target = $region13
    $region12: #{tpu_custom_call.1} parent=1 // pred_region
      _
    $region13: #{tpu_custom_call.1} parent=1 // pred_fallthru
      _
    // Predicated region
    $region14: #{tpu_custom_call.1} parent=1 // pred_check
      _
    $region15: #{tpu_custom_call.1} parent=1 // pred_check_branch
      %33 = sbr.rel (0) target = $region17
    $region16: #{tpu_custom_call.1} parent=1 // pred_region
      %s35 = ssub.s32 512, 512
      %36 = vsyncadd [#allocation6], %s35
      %s37 = sshll.u32 [#allocation5], 4
      %s38 = int_to_ptr.vmem [resolvable:$true] %s37
      %43 = dma.hbm_to_vmem [thread:$0]  %s3, 512, %s38, [#allocation6], 128, 128, 8
    $region17: #{tpu_custom_call.1} parent=1 // pred_fallthru
      _
    // Predicated region
    $region18: #{tpu_custom_call.1} parent=1 // pred_check
      _
    $region19: #{tpu_custom_call.1} parent=1 // pred_check_branch
      %45 = sbr.rel (0) target = $region21
    $region20: #{tpu_custom_call.1} parent=1 // pred_region
      _
    $region21: #{tpu_custom_call.1} parent=1 // pred_fallthru
      _
    // Predicated region
    $region22: #{tpu_custom_call.1} parent=1 // pred_check
      _
    $region23: #{tpu_custom_call.1} parent=1 // pred_check_branch
      %47 = sbr.rel (0) target = $region25
    $region24: #{tpu_custom_call.1} parent=1 // pred_region
      %48 = dma.done [#allocation3], 256
    $region25: #{tpu_custom_call.1} parent=1 // pred_fallthru
      _
    // Predicated region
    $region26: #{tpu_custom_call.1} parent=1 // pred_check
      _
    $region27: #{tpu_custom_call.1} parent=1 // pred_check_branch
      %50 = sbr.rel (0) target = $region29
    $region28: #{tpu_custom_call.1} parent=1 // pred_region
      %51 = dma.done [#allocation6], 512
    $region29: #{tpu_custom_call.1} parent=1 // pred_fallthru
      _
    %v52 = vld [vmem:[#allocation2] sm:$0xff]
    %v53 = vld [vmem:[#allocation2 + $0x8] sm:$0xff]
    %vm54 = vcmask 261120
    %v55 = vsel %vm54, %v52, 0.0
    %56 = vadd.xlane.f32.xlu0 %v55
    %v57 = vpop.xlane.xlu0 %56
    %v58 = vsel %vm54, %v53, 0.0
    %59 = vadd.xlane.f32.xlu0 %v58
    %v60 = vpop.xlane.xlu0 %59
    %v61 = vrcp.pop 32.0
    %v62 = vmul.f32 %v57, %v61
    %v63 = vmul.f32 %v60, %v61
    %v64 = vsub.f32 %v52, %v62
    %v65 = vsub.f32 %v53, %v63
    %v66 = vmul.f32 %v64, %v64
    %v67 = vmul.f32 %v65, %v65
    %v68 = vsel %vm54, %v66, 0.0
    %69 = vadd.xlane.f32.xlu0 %v68
    %v70 = vpop.xlane.xlu0 %69
    %v71 = vsel %vm54, %v67, 0.0
    %72 = vadd.xlane.f32.xlu0 %v71
    %v73 = vpop.xlane.xlu0 %72
    %v74 = vmul.f32 %v70, %v61
    %v75 = vmul.f32 %v73, %v61
    %v76 = vadd.f32 %v74, 1e-05
    %v77 = vadd.f32 %v75, 1e-05
    %v78 = vrsqrt.pop %v76
    %v79 = vrsqrt.pop %v77
    %v80 = vmul.f32 %v64, %v78
    %v81 = vmul.f32 %v65, %v79
    %v82 = vld [vmem:[%s1] sm:$0x1]
    %v84 = vlaneseq
    %v85 = vshrl.u32 %v84, 7
    %v86 = vsub.s32 0, %v85
    %v87 = vrot.slane %v82, %v86
    %v89 = vmul.f32 %v80, %v87
    %v90 = vmul.f32 %v81, %v87
    %v91 = vld [vmem:[%s2] sm:$0x1]
    %v93 = vlaneseq
    %v94 = vshrl.u32 %v93, 7
    %v95 = vsub.s32 0, %v94
    %v96 = vrot.slane %v91, %v95
    %v98 = vadd.f32 %v89, %v96
    %v99 = vadd.f32 %v90, %v96
    %v100 = vld [vmem:[#allocation5] sm:$0xff]
    %v101 = vld [vmem:[#allocation5 + $0x8] sm:$0xff]
    %v102 = vld [vmem:[#allocation5 + $0x10] sm:$0xff]
    %v103 = vld [vmem:[#allocation5 + $0x18] sm:$0xff]
    %v104 = vld [vmem:[%s4] sm:$0x1]
    %v106 = vlaneseq
    %v107 = vshrl.u32 %v106, 7
    %v108 = vsub.s32 0, %v107
    %v109 = vrot.slane %v104, %v108
    %v112 = vsel %vm54, %v98, 0
    %v115 = vsel %vm54, %v99, 0
    %117 = vmatprep.subr.mxu0 0.0
    %118 = vmatpush1.msra.mxu0 %v100
    %119 = vmatprep.subr.mxu0 0.0
    %120 = vmatpush1.msra.mxu0 %v101
    %121 = vmatprep.subr.mxu0 0.0
    %122 = vmatpush1.msra.mxu0 %v102
    %123 = vmatprep.subr.mxu0 0.0
    %124 = vmatpush1.msra.mxu0 %v103
    %125 = vmatprep.subr.mxu0 0.0
    %126 = vmatpush1.msra.mxu0 0.0
    %127 = vmatprep.subr.mxu0 0.0
    %128 = vmatpush1.msra.mxu0 0.0
    %129 = vmatprep.subr.mxu0 0.0
    %130 = vmatpush1.msra.mxu0 0.0
    %131 = vmatprep.subr.mxu0 0.0
    %132 = vmatpush1.msra.mxu0 0.0
    %133 = vmatprep.subr.mxu0 0.0
    %134 = vmatpush1.msra.mxu0 0.0
    %135 = vmatprep.subr.mxu0 0.0
    %136 = vmatpush1.msra.mxu0 0.0
    %137 = vmatprep.subr.mxu0 0.0
    %138 = vmatpush1.msra.mxu0 0.0
    %139 = vmatprep.subr.mxu0 0.0
    %140 = vmatpush1.msra.mxu0 0.0
    %141 = vmatprep.subr.mxu0 0.0
    %142 = vmatpush1.msra.mxu0 0.0
    %143 = vmatprep.subr.mxu0 0.0
    %144 = vmatpush1.msra.mxu0 0.0
    %145 = vmatprep.subr.mxu0 0.0
    %146 = vmatpush1.msra.mxu0 0.0
    %147 = vmatprep.subr.mxu0 0.0
    %148 = vmatpush1.msra.mxu0 0.0
    %149 = vmatprep.subr.mxu0 0.0
    %150 = vmatpush1.msra.mxu0 0.0
    %151 = vmatprep.subr.mxu0 0.0
    %152 = vmatpush1.msra.mxu0 0.0
    %153 = vmatprep.subr.mxu0 0.0
    %154 = vmatpush1.msra.mxu0 0.0
    %155 = vmatprep.subr.mxu0 0.0
    %156 = vmatpush1.msra.mxu0 0.0
    %157 = vmatprep.subr.mxu0 0.0
    %158 = vmatpush1.msra.mxu0 0.0
    %159 = vmatprep.subr.mxu0 0.0
    %160 = vmatpush1.msra.mxu0 0.0
    %161 = vmatprep.subr.mxu0 0.0
    %162 = vmatpush1.msra.mxu0 0.0
    %163 = vmatprep.subr.mxu0 0.0
    %164 = vmatpush1.msra.mxu0 0.0
    %165 = vmatprep.subr.mxu0 0.0
    %166 = vmatpush1.msra.mxu0 0.0
    %167 = vmatprep.subr.mxu0 0.0
    %168 = vmatpush1.msra.mxu0 0.0
    %169 = vmatprep.subr.mxu0 0.0
    %170 = vmatpush1.msra.mxu0 0.0
    %171 = vmatprep.subr.mxu0 0.0
    %172 = vmatpush1.msra.mxu0 0.0
    %173 = vmatprep.subr.mxu0 0.0
    %174 = vmatpush1.msra.mxu0 0.0
    %175 = vmatprep.subr.mxu0 0.0
    %176 = vmatpush1.msra.mxu0 0.0
    %177 = vmatprep.subr.mxu0 0.0
    %178 = vmatpush1.msra.mxu0 0.0
    %179 = vmatprep.subr.mxu0 0.0
    %180 = vmatpush1.msra.mxu0 0.0
    %181 = vmatprep.mubr.f32.mxu0 0.0
    %182 = vmatmul.mubr.f32.gmra.mrb[0].mxu0 %v112
    %v183 = vpop.f32.mrb[0].mxu0
    %v184 = vadd.f32 %v109, %v183
    %v185 = vpop.f32.mrb[0].mxu0
    %186 = vmatprep.mubr.f32.mxu0 0.0
    %187 = vmatmul.mubr.f32.gmra.mrb[0].mxu0 %v115
    %v188 = vpop.f32.mrb[0].mxu0
    %v189 = vadd.f32 %v109, %v188
    %v190 = vpop.f32.mrb[0].mxu0
    %191 = vdwg.mxu0
    %194 = vrot.lane.b32.xlu0 %v184, 96
    %v195 = vpop.permute.xlu0 %194
    %196 = vrot.lane.b32.xlu0 %v189, 96
    %v197 = vpop.permute.xlu0 %196
    %v198 = vsel %vm54, %v184, 0
    %v200 = vsel %vm54, %v189, 0
    %v202 = vsel %vm54, %v195, 0
    %v204 = vsel %vm54, %v197, 0
    %206 = vmatprep.subr.mxu0 0.0
    %207 = vmatpush1.xpose.msra.mxu0 %v202
    %208 = vmatprep.subr.mxu0 0.0
    %209 = vmatpush1.xpose.msra.mxu0 %v204
    %210 = vmatprep.subr.mxu0 0.0
    %211 = vmatpush1.xpose.msra.mxu0 0.0
    %212 = vmatprep.subr.mxu0 0.0
    %213 = vmatpush1.xpose.msra.mxu0 0.0
    %214 = vmatprep.subr.mxu0 0.0
    %215 = vmatpush1.xpose.msra.mxu0 0.0
    %216 = vmatprep.subr.mxu0 0.0
    %217 = vmatpush1.xpose.msra.mxu0 0.0
    %218 = vmatprep.subr.mxu0 0.0
    %219 = vmatpush1.xpose.msra.mxu0 0.0
    %220 = vmatprep.subr.mxu0 0.0
    %221 = vmatpush1.xpose.msra.mxu0 0.0
    %222 = vmatprep.subr.mxu0 0.0
    %223 = vmatpush1.xpose.msra.mxu0 0.0
    %224 = vmatprep.subr.mxu0 0.0
    %225 = vmatpush1.xpose.msra.mxu0 0.0
    %226 = vmatprep.subr.mxu0 0.0
    %227 = vmatpush1.xpose.msra.mxu0 0.0
    %228 = vmatprep.subr.mxu0 0.0
    %229 = vmatpush1.xpose.msra.mxu0 0.0
    %230 = vmatprep.subr.mxu0 0.0
    %231 = vmatpush1.xpose.msra.mxu0 0.0
    %232 = vmatprep.subr.mxu0 0.0
    %233 = vmatpush1.xpose.msra.mxu0 0.0
    %234 = vmatprep.subr.mxu0 0.0
    %235 = vmatpush1.xpose.msra.mxu0 0.0
    %236 = vmatprep.subr.mxu0 0.0
    %237 = vmatpush1.xpose.msra.mxu0 0.0
    %238 = vmatprep.subr.mxu0 0.0
    %239 = vmatpush1.xpose.msra.mxu0 0.0
    %240 = vmatprep.subr.mxu0 0.0
    %241 = vmatpush1.xpose.msra.mxu0 0.0
    %242 = vmatprep.subr.mxu0 0.0
    %243 = vmatpush1.xpose.msra.mxu0 0.0
    %244 = vmatprep.subr.mxu0 0.0
    %245 = vmatpush1.xpose.msra.mxu0 0.0
    %246 = vmatprep.subr.mxu0 0.0
    %247 = vmatpush1.xpose.msra.mxu0 0.0
    %248 = vmatprep.subr.mxu0 0.0
    %249 = vmatpush1.xpose.msra.mxu0 0.0
    %250 = vmatprep.subr.mxu0 0.0
    %251 = vmatpush1.xpose.msra.mxu0 0.0
    %252 = vmatprep.subr.mxu0 0.0
    %253 = vmatpush1.xpose.msra.mxu0 0.0
    %254 = vmatprep.subr.mxu0 0.0
    %255 = vmatpush1.xpose.msra.mxu0 0.0
    %256 = vmatprep.subr.mxu0 0.0
    %257 = vmatpush1.xpose.msra.mxu0 0.0
    %258 = vmatprep.subr.mxu0 0.0
    %259 = vmatpush1.xpose.msra.mxu0 0.0
    %260 = vmatprep.subr.mxu0 0.0
    %261 = vmatpush1.xpose.msra.mxu0 0.0
    %262 = vmatprep.subr.mxu0 0.0
    %263 = vmatpush1.xpose.msra.mxu0 0.0
    %264 = vmatprep.subr.mxu0 0.0
    %265 = vmatpush1.xpose.msra.mxu0 0.0
    %266 = vmatprep.subr.mxu0 0.0
    %267 = vmatpush1.xpose.msra.mxu0 0.0
    %268 = vmatprep.subr.mxu0 0.0
    %269 = vmatpush1.xpose.msra.mxu0 0.0
    %270 = vmatprep.mubr.f32.mxu0 0.0
    %271 = vmatmul.mubr.f32.gmra.mrb[0].mxu0 %v198
    %v272 = vpop.f32.mrb[0].mxu0
    %v273 = vadd.f32 0.0, %v272
    %v274 = vpop.f32.mrb[0].mxu0
    %275 = vmatprep.mubr.f32.mxu0 0.0
    %276 = vmatmul.mubr.f32.gmra.mrb[0].mxu0 %v200
    %v277 = vpop.f32.mrb[0].mxu0
    %v278 = vadd.f32 0.0, %v277
    %v279 = vpop.f32.mrb[0].mxu0
    %280 = vdwg.mxu0
    %v281 = vlaneseq
    %v282 = vshrl.u32 %v281, 7
    %v283 = vadd.s32 %v282, 8
    %v284 = vlaneseq
    %v285 = vand.u32 %v284, 127
    %v286 = vcvt.s32.f32 %v282
    %v287 = vcvt.s32.f32 %v283
    %v288 = vadd.f32 %v286, 0.5
    %v289 = vadd.f32 %v287, 0.5
    %v290 = vmul.f32 %v288, 0.125
    %v291 = vmul.f32 %v289, 0.125
    %v292 = vfloor.f32 %v290
    %v293 = vfloor.f32 %v291
    %v294 = vcvt.s32.f32 %v285
    %v295 = vadd.f32 %v294, 0.5
    %v296 = vmul.f32 %v295, 0.125
    %v297 = vfloor.f32 %v296
    %vm298 = vcmp.eq.f32.partialorder %v292, %v297
    %vm299 = vcmp.eq.f32.partialorder %v293, %v297
    %v300 = vsel %vm298, %v273, -inf
    %v301 = vsel %vm299, %v278, -inf
    %vm302 = vcmask 130048
    %v303 = vsel %vm302, %v300, -inf
    %304 = vmax.xlane.f32.xlu0 %v303
    %v305 = vpop.xlane.xlu0 %304
    %v306 = vsel %vm302, %v301, -inf
    %307 = vmax.xlane.f32.xlu0 %v306
    %v308 = vpop.xlane.xlu0 %307
    %v309 = vsub.f32 %v300, %v305
    %v310 = vsub.f32 %v301, %v308
    %v311 = vmul.f32 %v309, 1.442695
    %v312 = vpow.pop %v311
    %v313 = vmul.f32 %v310, 1.442695
    %v314 = vpow.pop %v313
    %v315 = vsel %vm302, %v312, 0.0
    %316 = vadd.xlane.f32.xlu0 %v315
    %v317 = vpop.xlane.xlu0 %316
    %v318 = vsel %vm302, %v314, 0.0
    %319 = vadd.xlane.f32.xlu0 %v318
    %v320 = vpop.xlane.xlu0 %319
    %v321 = vrcp.pop %v317
    %v322 = vrcp.pop %v320
    %v323 = vmul.f32 %v312, %v321
    %v324 = vmul.f32 %v314, %v322
    %325 = vrot.lane.b32.xlu0 %v184, 64
    %v326 = vpop.permute.xlu0 %325
    %327 = vrot.lane.b32.xlu0 %v189, 64
    %v328 = vpop.permute.xlu0 %327
    %v332 = vsel %vm302, %v323, 0
    %v335 = vsel %vm302, %v324, 0
    %337 = vmatprep.subr.mxu0 0.0
    %338 = vmatpush1.msra.mxu0 %v326
    %339 = vmatprep.subr.mxu0 0.0
    %340 = vmatpush1.msra.mxu0 %v328
    %341 = vmatprep.subr.mxu0 0.0
    %342 = vmatpush1.msra.mxu0 0.0
    %343 = vmatprep.subr.mxu0 0.0
    %344 = vmatpush1.msra.mxu0 0.0
    %345 = vmatprep.subr.mxu0 0.0
    %346 = vmatpush1.msra.mxu0 0.0
    %347 = vmatprep.subr.mxu0 0.0
    %348 = vmatpush1.msra.mxu0 0.0
    %349 = vmatprep.subr.mxu0 0.0
    %350 = vmatpush1.msra.mxu0 0.0
    %351 = vmatprep.subr.mxu0 0.0
    %352 = vmatpush1.msra.mxu0 0.0
    %353 = vmatprep.subr.mxu0 0.0
    %354 = vmatpush1.msra.mxu0 0.0
    %355 = vmatprep.subr.mxu0 0.0
    %356 = vmatpush1.msra.mxu0 0.0
    %357 = vmatprep.subr.mxu0 0.0
    %358 = vmatpush1.msra.mxu0 0.0
    %359 = vmatprep.subr.mxu0 0.0
    %360 = vmatpush1.msra.mxu0 0.0
    %361 = vmatprep.subr.mxu0 0.0
    %362 = vmatpush1.msra.mxu0 0.0
    %363 = vmatprep.subr.mxu0 0.0
    %364 = vmatpush1.msra.mxu0 0.0
    %365 = vmatprep.subr.mxu0 0.0
    %366 = vmatpush1.msra.mxu0 0.0
    %367 = vmatprep.subr.mxu0 0.0
    %368 = vmatpush1.msra.mxu0 0.0
    %369 = vmatprep.subr.mxu0 0.0
    %370 = vmatpush1.msra.mxu0 0.0
    %371 = vmatprep.subr.mxu0 0.0
    %372 = vmatpush1.msra.mxu0 0.0
    %373 = vmatprep.subr.mxu0 0.0
    %374 = vmatpush1.msra.mxu0 0.0
    %375 = vmatprep.subr.mxu0 0.0
    %376 = vmatpush1.msra.mxu0 0.0
    %377 = vmatprep.subr.mxu0 0.0
    %378 = vmatpush1.msra.mxu0 0.0
    %379 = vmatprep.subr.mxu0 0.0
    %380 = vmatpush1.msra.mxu0 0.0
    %381 = vmatprep.subr.mxu0 0.0
    %382 = vmatpush1.msra.mxu0 0.0
    %383 = vmatprep.subr.mxu0 0.0
    %384 = vmatpush1.msra.mxu0 0.0
    %385 = vmatprep.subr.mxu0 0.0
    %386 = vmatpush1.msra.mxu0 0.0
    %387 = vmatprep.subr.mxu0 0.0
    %388 = vmatpush1.msra.mxu0 0.0
    %389 = vmatprep.subr.mxu0 0.0
    %390 = vmatpush1.msra.mxu0 0.0
    %391 = vmatprep.subr.mxu0 0.0
    %392 = vmatpush1.msra.mxu0 0.0
    %393 = vmatprep.subr.mxu0 0.0
    %394 = vmatpush1.msra.mxu0 0.0
    %395 = vmatprep.subr.mxu0 0.0
    %396 = vmatpush1.msra.mxu0 0.0
    %397 = vmatprep.subr.mxu0 0.0
    %398 = vmatpush1.msra.mxu0 0.0
    %399 = vmatprep.subr.mxu0 0.0
    %400 = vmatpush1.msra.mxu0 0.0
    %401 = vmatprep.mubr.f32.mxu0 0.0
    %402 = vmatmul.mubr.f32.gmra.mrb[0].mxu0 %v332
    %v403 = vpop.f32.mrb[0].mxu0
    %v404 = vadd.f32 0.0, %v403
    %v405 = vpop.f32.mrb[0].mxu0
    %406 = vmatprep.mubr.f32.mxu0 0.0
    %407 = vmatmul.mubr.f32.gmra.mrb[0].mxu0 %v335
    %v408 = vpop.f32.mrb[0].mxu0
    %v409 = vadd.f32 0.0, %v408
    %v410 = vpop.f32.mrb[0].mxu0
    %411 = vdwg.mxu0
    %v412 = vsel %vm54, %v404, 0.0
    %v413 = vrot.slane %v412, 4
    %v414 = vadd.f32 %v412, %v413
    %v415 = vrot.slane %v414, 2
    %v416 = vadd.f32 %v414, %v415
    %v417 = vrot.slane %v416, 1
    %v418 = vadd.f32 %v416, %v417
    %v419 = vsel %vm54, %v409, 0.0
    %v420 = vrot.slane %v419, 4
    %v421 = vadd.f32 %v419, %v420
    %v422 = vrot.slane %v421, 2
    %v423 = vadd.f32 %v421, %v422
    %v424 = vrot.slane %v423, 1
    %v425 = vadd.f32 %v423, %v424
    %v426 = vrcp.pop 8.0
    %v427 = vmul.f32 %v418, %v426
    %v428 = vmul.f32 %v425, %v426
    %vm431 = vcmask 1041409
    %v432 = vsel %vm431, %v428, %v427
    %vm434 = vcmask 254976
    %435 = vst.msk [vmem:[#allocation7] sm:$0x3] %vm434, %v432
    %v436 = vmul.f32 %v292, 8.0
    %v437 = vmul.f32 %v293, 8.0
    %v438 = vsub.f32 %v286, %v436
    %v439 = vsub.f32 %v287, %v437
    %vm440 = vcmp.eq.f32.partialorder %v438, %v294
    %vm441 = vcmp.eq.f32.partialorder %v439, %v294
    %v442 = vsel %vm440, 1, 0
    %v443 = vsel %vm441, 1, 0
    %v444 = vcvt.s32.f32 %v442
    %v445 = vcvt.s32.f32 %v443
    %446 = vmatprep.subr.mxu0 0.0
    %447 = vmatpush1.msra.mxu0 %v444
    %448 = vmatprep.subr.mxu0 0.0
    %449 = vmatpush1.msra.mxu0 %v445
    %450 = vmatprep.subr.mxu0 0.0
    %451 = vmatpush1.msra.mxu0 0.0
    %452 = vmatprep.subr.mxu0 0.0
    %453 = vmatpush1.msra.mxu0 0.0
    %454 = vmatprep.subr.mxu0 0.0
    %455 = vmatpush1.msra.mxu0 0.0
    %456 = vmatprep.subr.mxu0 0.0
    %457 = vmatpush1.msra.mxu0 0.0
    %458 = vmatprep.subr.mxu0 0.0
    %459 = vmatpush1.msra.mxu0 0.0
    %460 = vmatprep.subr.mxu0 0.0
    %461 = vmatpush1.msra.mxu0 0.0
    %462 = vmatprep.subr.mxu0 0.0
    %463 = vmatpush1.msra.mxu0 0.0
    %464 = vmatprep.subr.mxu0 0.0
    %465 = vmatpush1.msra.mxu0 0.0
    %466 = vmatprep.subr.mxu0 0.0
    %467 = vmatpush1.msra.mxu0 0.0
    %468 = vmatprep.subr.mxu0 0.0
    %469 = vmatpush1.msra.mxu0 0.0
    %470 = vmatprep.subr.mxu0 0.0
    %471 = vmatpush1.msra.mxu0 0.0
    %472 = vmatprep.subr.mxu0 0.0
    %473 = vmatpush1.msra.mxu0 0.0
    %474 = vmatprep.subr.mxu0 0.0
    %475 = vmatpush1.msra.mxu0 0.0
    %476 = vmatprep.subr.mxu0 0.0
    %477 = vmatpush1.msra.mxu0 0.0
    %478 = vmatprep.subr.mxu0 0.0
    %479 = vmatpush1.msra.mxu0 0.0
    %480 = vmatprep.subr.mxu0 0.0
    %481 = vmatpush1.msra.mxu0 0.0
    %482 = vmatprep.subr.mxu0 0.0
    %483 = vmatpush1.msra.mxu0 0.0
    %484 = vmatprep.subr.mxu0 0.0
    %485 = vmatpush1.msra.mxu0 0.0
    %486 = vmatprep.subr.mxu0 0.0
    %487 = vmatpush1.msra.mxu0 0.0
    %488 = vmatprep.subr.mxu0 0.0
    %489 = vmatpush1.msra.mxu0 0.0
    %490 = vmatprep.subr.mxu0 0.0
    %491 = vmatpush1.msra.mxu0 0.0
    %492 = vmatprep.subr.mxu0 0.0
    %493 = vmatpush1.msra.mxu0 0.0
    %494 = vmatprep.subr.mxu0 0.0
    %495 = vmatpush1.msra.mxu0 0.0
    %496 = vmatprep.subr.mxu0 0.0
    %497 = vmatpush1.msra.mxu0 0.0
    %498 = vmatprep.subr.mxu0 0.0
    %499 = vmatpush1.msra.mxu0 0.0
    %500 = vmatprep.subr.mxu0 0.0
    %501 = vmatpush1.msra.mxu0 0.0
    %502 = vmatprep.subr.mxu0 0.0
    %503 = vmatpush1.msra.mxu0 0.0
    %504 = vmatprep.subr.mxu0 0.0
    %505 = vmatpush1.msra.mxu0 0.0
    %506 = vmatprep.subr.mxu0 0.0
    %507 = vmatpush1.msra.mxu0 0.0
    %508 = vmatprep.subr.mxu0 0.0
    %509 = vmatpush1.msra.mxu0 0.0
    %510 = vmatprep.mubr.f32.mxu0 0.0
    %511 = vmatmul.mubr.f32.gmra.mrb[0].mxu0 %v332
    %v512 = vpop.f32.mrb[0].mxu0
    %v513 = vadd.f32 0.0, %v512
    %v514 = vpop.f32.mrb[0].mxu0
    %515 = vmatprep.mubr.f32.mxu0 0.0
    %516 = vmatmul.mubr.f32.gmra.mrb[0].mxu0 %v335
    %v517 = vpop.f32.mrb[0].mxu0
    %v518 = vadd.f32 0.0, %v517
    %v519 = vpop.f32.mrb[0].mxu0
    %520 = vdwg.mxu0
    %vm521 = vcmask 64512
    %522 = vst.msk [vmem:[#allocation8] sm:$0xff] %vm521, %v513
    %523 = vst.msk [vmem:[#allocation8 + $0x8] sm:$0xff] %vm521, %v518
    // Predicated region
    $region30: #{tpu_custom_call.1} parent=1 // pred_check
      _
    $region31: #{tpu_custom_call.1} parent=1 // pred_check_branch
      %525 = sbr.rel (0) target = $region33
    $region32: #{tpu_custom_call.1} parent=1 // pred_region
      %s527 = ssub.s32 32, 32
      %528 = vsyncadd [#allocation4], %s527
      %s530 = sshll.u32 [#allocation7], 4
      %s531 = int_to_ptr.vmem [resolvable:$true] %s530
      %533 = dma.vmem_to_hbm [thread:$0]  %s531, 32, %s5, [#allocation4]
    $region33: #{tpu_custom_call.1} parent=1 // pred_fallthru
      _
    // Predicated region
    $region34: #{tpu_custom_call.1} parent=1 // pred_check
      _
    $region35: #{tpu_custom_call.1} parent=1 // pred_check_branch
      %535 = sbr.rel (0) target = $region37
    $region36: #{tpu_custom_call.1} parent=1 // pred_region
      %s537 = ssub.s32 256, 256
      %538 = vsyncadd [#allocation9], %s537
      %s539 = sshll.u32 [#allocation8], 4
      %s540 = int_to_ptr.vmem [resolvable:$true] %s539
      %545 = dma.vmem_to_hbm [thread:$0]  %s540, 256, %s6, [#allocation9], 128, 128, 8
    $region37: #{tpu_custom_call.1} parent=1 // pred_fallthru
      _
    // Predicated region
    $region38: #{tpu_custom_call.1} parent=1 // pred_check
      _
    $region39: #{tpu_custom_call.1} parent=1 // pred_check_branch
      %547 = sbr.rel (0) target = $region41
    $region40: #{tpu_custom_call.1} parent=1 // pred_region
      %548 = dma.done [#allocation4], 32
    $region41: #{tpu_custom_call.1} parent=1 // pred_fallthru
      _
    // Predicated region
    $region42: #{tpu_custom_call.1} parent=1 // pred_check
      _
    $region43: #{tpu_custom_call.1} parent=1 // pred_check_branch
      %550 = sbr.rel (0) target = $region45
    $region44: #{tpu_custom_call.1} parent=1 // pred_region
      %551 = dma.done [#allocation9], 256
    $region45: #{tpu_custom_call.1} parent=1 // pred_fallthru
      _
    %552 = vsyncpa [#allocation3], 1
    %553 = vsyncpa [#allocation6], 1
    %554 = vsyncpa [#allocation4], 1
    %555 = vsyncpa [#allocation9], 1

// kernel: tpu_custom_call.1
$region0: #{tpu_custom_call.1}
  #allocation0 [shape = 'u32[]', space=smem, size = 0x4, offset = 0x4, fixed_abs, tag = 'smem constant byte address 0x4 - core index']
  #allocation1 [shape = 'u32[144,128]{1,0:T(1,128)}', space=vmem, size = 0x12000, scoped, tag = 'internal scratch']
  %s0 = inlined_call_operand.hbm [shape: f32[2,8,32], index: 0, kind: input, shape index: {}]
  %s1 = inlined_call_operand.vmem [shape: f32[1,32], index: 1, kind: input, shape index: {}]
  %s2 = inlined_call_operand.vmem [shape: f32[1,32], index: 2, kind: input, shape index: {}]
  %s3 = inlined_call_operand.hbm [shape: f32[32,96], index: 3, kind: input, shape index: {}]
  %s4 = inlined_call_operand.vmem [shape: f32[1,96], index: 4, kind: input, shape index: {}]
  %s5 = inlined_call_operand.hbm [shape: f32[2,32], index: 5, kind: output, shape index: {0}]
  %s6 = inlined_call_operand.hbm [shape: f32[2,8,8], index: 6, kind: output, shape index: {1}]
  %7 = xla_tuple %s5, %s6
  %s8 = sld [smem:[#allocation0]]
  $region46: #{tpu_custom_call.1} parent=0
    _
  %s10 = ssub.s32 1, %s8
  %s11 = scalar_select 0, %s10, %s8
  $region1: #{tpu_custom_call.1} parent=0
    #allocation2 [shape = 'u8[8192]{0}', space=vmem, size = 0x2000, scoped, tag = 'input window, operand 0, single buffered']
    #allocation3 [shape = 's32[1]{0}', space=sflag, size = 0x4, scoped, tag = 'scoped memory for tpu_custom_call.1']
    #allocation4 [shape = 's32[1]{0}', space=sflag, size = 0x4, scoped, tag = 'scoped memory for tpu_custom_call.1']
    #allocation5 [shape = 'u8[16384]{0}', space=vmem, size = 0x4000, scoped, tag = 'input window, operand 3, single buffered']
    #allocation6 [shape = 's32[1]{0}', space=sflag, size = 0x4, scoped, tag = 'scoped memory for tpu_custom_call.1']
    #allocation7 [shape = 'u8[1024]{0}', space=vmem, size = 0x400, scoped, tag = 'output window, operand 0, single buffered']
    #allocation8 [shape = 'u8[8192]{0}', space=vmem, size = 0x2000, scoped, tag = 'output window, operand 1, single buffered']
    #allocation9 [shape = 's32[1]{0}', space=sflag, size = 0x4, scoped, tag = 'scoped memory for tpu_custom_call.1']
    %12 = vsyncpa [#allocation3], 0
    %13 = vsyncpa [#allocation6], 0
    %14 = vsyncpa [#allocation4], 0
    %15 = vsyncpa [#allocation9], 0
    // Predicated region
    $region2: #{tpu_custom_call.1} parent=1 // pred_check
      _
    $region3: #{tpu_custom_call.1} parent=1 // pred_check_branch
      %17 = sbr.rel (0) target = $region5
    $region4: #{tpu_custom_call.1} parent=1 // pred_region
      %s19 = ssub.s32 256, 256
      %20 = vsyncadd [#allocation3], %s19
      %s21 = sshll.u32 [#allocation2], 4
      %s22 = int_to_ptr.vmem [resolvable:$true] %s21
      %27 = dma.hbm_to_vmem [thread:$0]  %s0, 256, %s22, [#allocation3], 128, 128, 8
    $region5: #{tpu_custom_call.1} parent=1 // pred_fallthru
      _
    // Predicated region
    $region6: #{tpu_custom_call.1} parent=1 // pred_check
      _
    $region7: #{tpu_custom_call.1} parent=1 // pred_check_branch
      %29 = sbr.rel (0) target = $region9
    $region8: #{tpu_custom_call.1} parent=1 // pred_region
      _
    $region9: #{tpu_custom_call.1} parent=1 // pred_fallthru
      _
    // Predicated region
    $region10: #{tpu_custom_call.1} parent=1 // pred_check
      _
    $region11: #{tpu_custom_call.1} parent=1 // pred_check_branch
      %31 = sbr.rel (0) target = $region13
    $region12: #{tpu_custom_call.1} parent=1 // pred_region
      _
    $region13: #{tpu_custom_call.1} parent=1 // pred_fallthru
      _
    // Predicated region
    $region14: #{tpu_custom_call.1} parent=1 // pred_check
      _
    $region15: #{tpu_custom_call.1} parent=1 // pred_check_branch
      %33 = sbr.rel (0) target = $region17
    $region16: #{tpu_custom_call.1} parent=1 // pred_region
      %s35 = ssub.s32 512, 512
      %36 = vsyncadd [#allocation6], %s35
      %s37 = sshll.u32 [#allocation5], 4
      %s38 = int_to_ptr.vmem [resolvable:$true] %s37
      %43 = dma.hbm_to_vmem [thread:$0]  %s3, 512, %s38, [#allocation6], 128, 128, 8
    $region17: #{tpu_custom_call.1} parent=1 // pred_fallthru
      _
    // Predicated region
    $region18: #{tpu_custom_call.1} parent=1 // pred_check
      _
    $region19: #{tpu_custom_call.1} parent=1 // pred_check_branch
      %45 = sbr.rel (0) target = $region21
    $region20: #{tpu_custom_call.1} parent=1 // pred_region
      _
    $region21: #{tpu_custom_call.1} parent=1 // pred_fallthru
      _
    // Predicated region
    $region22: #{tpu_custom_call.1} parent=1 // pred_check
      _
    $region23: #{tpu_custom_call.1} parent=1 // pred_check_branch
      %47 = sbr.rel (0) target = $region25
    $region24: #{tpu_custom_call.1} parent=1 // pred_region
      %48 = dma.done [#allocation3], 256
    $region25: #{tpu_custom_call.1} parent=1 // pred_fallthru
      _
    // Predicated region
    $region26: #{tpu_custom_call.1} parent=1 // pred_check
      _
    $region27: #{tpu_custom_call.1} parent=1 // pred_check_branch
      %50 = sbr.rel (0) target = $region29
    $region28: #{tpu_custom_call.1} parent=1 // pred_region
      %51 = dma.done [#allocation6], 512
    $region29: #{tpu_custom_call.1} parent=1 // pred_fallthru
      _
    %v52 = vld [vmem:[#allocation2] sm:$0xff]
    %v53 = vld [vmem:[#allocation2 + $0x8] sm:$0xff]
    %vm54 = vcmask 261120
    %v55 = vsel %vm54, %v52, 0.0
    %56 = vadd.xlane.f32.xlu0 %v55
    %v57 = vpop.xlane.xlu0 %56
    %v58 = vsel %vm54, %v53, 0.0
    %59 = vadd.xlane.f32.xlu0 %v58
    %v60 = vpop.xlane.xlu0 %59
    %v61 = vrcp.pop 32.0
    %v62 = vmul.f32 %v57, %v61
    %v63 = vmul.f32 %v60, %v61
    %v64 = vsub.f32 %v52, %v62
    %v65 = vsub.f32 %v53, %v63
    %v66 = vmul.f32 %v64, %v64
    %v67 = vmul.f32 %v65, %v65
    %v68 = vsel %vm54, %v66, 0.0
    %69 = vadd.xlane.f32.xlu0 %v68
    %v70 = vpop.xlane.xlu0 %69
    %v71 = vsel %vm54, %v67, 0.0
    %72 = vadd.xlane.f32.xlu0 %v71
    %v73 = vpop.xlane.xlu0 %72
    %v74 = vmul.f32 %v70, %v61
    %v75 = vmul.f32 %v73, %v61
    %v76 = vadd.f32 %v74, 1e-05
    %v77 = vadd.f32 %v75, 1e-05
    %v78 = vrsqrt.pop %v76
    %v79 = vrsqrt.pop %v77
    %v80 = vmul.f32 %v64, %v78
    %v81 = vmul.f32 %v65, %v79
    %v82 = vld [vmem:[%s1] sm:$0x1]
    %v84 = vlaneseq
    %v85 = vshrl.u32 %v84, 7
    %v86 = vsub.s32 0, %v85
    %v87 = vrot.slane %v82, %v86
    %v89 = vmul.f32 %v80, %v87
    %v90 = vmul.f32 %v81, %v87
    %v91 = vld [vmem:[%s2] sm:$0x1]
    %v93 = vlaneseq
    %v94 = vshrl.u32 %v93, 7
    %v95 = vsub.s32 0, %v94
    %v96 = vrot.slane %v91, %v95
    %v98 = vadd.f32 %v89, %v96
    %v99 = vadd.f32 %v90, %v96
    %v100 = vld [vmem:[#allocation5] sm:$0xff]
    %v101 = vld [vmem:[#allocation5 + $0x8] sm:$0xff]
    %v102 = vld [vmem:[#allocation5 + $0x10] sm:$0xff]
    %v103 = vld [vmem:[#allocation5 + $0x18] sm:$0xff]
    %v104 = vld [vmem:[%s4] sm:$0x1]
    %v106 = vlaneseq
    %v107 = vshrl.u32 %v106, 7
    %v108 = vsub.s32 0, %v107
    %v109 = vrot.slane %v104, %v108
    %v112 = vsel %vm54, %v98, 0
    %v115 = vsel %vm54, %v99, 0
    %117 = vmatprep.subr.mxu0 0.0
    %118 = vmatpush1.msra.mxu0 %v100
    %119 = vmatprep.subr.mxu0 0.0
    %120 = vmatpush1.msra.mxu0 %v101
    %121 = vmatprep.subr.mxu0 0.0
    %122 = vmatpush1.msra.mxu0 %v102
    %123 = vmatprep.subr.mxu0 0.0
    %124 = vmatpush1.msra.mxu0 %v103
    %125 = vmatprep.subr.mxu0 0.0
    %126 = vmatpush1.msra.mxu0 0.0
    %127 = vmatprep.subr.mxu0 0.0
    %128 = vmatpush1.msra.mxu0 0.0
    %129 = vmatprep.subr.mxu0 0.0
    %130 = vmatpush1.msra.mxu0 0.0
    %131 = vmatprep.subr.mxu0 0.0
    %132 = vmatpush1.msra.mxu0 0.0
    %133 = vmatprep.subr.mxu0 0.0
    %134 = vmatpush1.msra.mxu0 0.0
    %135 = vmatprep.subr.mxu0 0.0
    %136 = vmatpush1.msra.mxu0 0.0
    %137 = vmatprep.subr.mxu0 0.0
    %138 = vmatpush1.msra.mxu0 0.0
    %139 = vmatprep.subr.mxu0 0.0
    %140 = vmatpush1.msra.mxu0 0.0
    %141 = vmatprep.subr.mxu0 0.0
    %142 = vmatpush1.msra.mxu0 0.0
    %143 = vmatprep.subr.mxu0 0.0
    %144 = vmatpush1.msra.mxu0 0.0
    %145 = vmatprep.subr.mxu0 0.0
    %146 = vmatpush1.msra.mxu0 0.0
    %147 = vmatprep.subr.mxu0 0.0
    %148 = vmatpush1.msra.mxu0 0.0
    %149 = vmatprep.subr.mxu0 0.0
    %150 = vmatpush1.msra.mxu0 0.0
    %151 = vmatprep.subr.mxu0 0.0
    %152 = vmatpush1.msra.mxu0 0.0
    %153 = vmatprep.subr.mxu0 0.0
    %154 = vmatpush1.msra.mxu0 0.0
    %155 = vmatprep.subr.mxu0 0.0
    %156 = vmatpush1.msra.mxu0 0.0
    %157 = vmatprep.subr.mxu0 0.0
    %158 = vmatpush1.msra.mxu0 0.0
    %159 = vmatprep.subr.mxu0 0.0
    %160 = vmatpush1.msra.mxu0 0.0
    %161 = vmatprep.subr.mxu0 0.0
    %162 = vmatpush1.msra.mxu0 0.0
    %163 = vmatprep.subr.mxu0 0.0
    %164 = vmatpush1.msra.mxu0 0.0
    %165 = vmatprep.subr.mxu0 0.0
    %166 = vmatpush1.msra.mxu0 0.0
    %167 = vmatprep.subr.mxu0 0.0
    %168 = vmatpush1.msra.mxu0 0.0
    %169 = vmatprep.subr.mxu0 0.0
    %170 = vmatpush1.msra.mxu0 0.0
    %171 = vmatprep.subr.mxu0 0.0
    %172 = vmatpush1.msra.mxu0 0.0
    %173 = vmatprep.subr.mxu0 0.0
    %174 = vmatpush1.msra.mxu0 0.0
    %175 = vmatprep.subr.mxu0 0.0
    %176 = vmatpush1.msra.mxu0 0.0
    %177 = vmatprep.subr.mxu0 0.0
    %178 = vmatpush1.msra.mxu0 0.0
    %179 = vmatprep.subr.mxu0 0.0
    %180 = vmatpush1.msra.mxu0 0.0
    %181 = vmatprep.mubr.f32.mxu0 0.0
    %182 = vmatmul.mubr.f32.gmra.mrb[0].mxu0 %v112
    %v183 = vpop.f32.mrb[0].mxu0
    %v184 = vadd.f32 %v109, %v183
    %v185 = vpop.f32.mrb[0].mxu0
    %186 = vmatprep.mubr.f32.mxu0 0.0
    %187 = vmatmul.mubr.f32.gmra.mrb[0].mxu0 %v115
    %v188 = vpop.f32.mrb[0].mxu0
    %v189 = vadd.f32 %v109, %v188
    %v190 = vpop.f32.mrb[0].mxu0
    %191 = vdwg.mxu0
    %194 = vrot.lane.b32.xlu0 %v184, 96
    %v195 = vpop.permute.xlu0 %194
    %196 = vrot.lane.b32.xlu0 %v189, 96
    %v197 = vpop.permute.xlu0 %196
    %v198 = vsel %vm54, %v184, 0
    %v200 = vsel %vm54, %v189, 0
    %v202 = vsel %vm54, %v195, 0
    %v204 = vsel %vm54, %v197, 0
    %206 = vmatprep.subr.mxu0 0.0
    %207 = vmatpush1.xpose.msra.mxu0 %v202
    %208 = vmatprep.subr.mxu0 0.0
    %209 = vmatpush1.xpose.msra.mxu0 %v204
    %210 = vmatprep.subr.mxu0 0.0
    %211 = vmatpush1.xpose.msra.mxu0 0.0
    %212 = vmatprep.subr.mxu0 0.0
    %213 = vmatpush1.xpose.msra.mxu0 0.0
    %214 = vmatprep.subr.mxu0 0.0
    %215 = vmatpush1.xpose.msra.mxu0 0.0
    %216 = vmatprep.subr.mxu0 0.0
    %217 = vmatpush1.xpose.msra.mxu0 0.0
    %218 = vmatprep.subr.mxu0 0.0
    %219 = vmatpush1.xpose.msra.mxu0 0.0
    %220 = vmatprep.subr.mxu0 0.0
    %221 = vmatpush1.xpose.msra.mxu0 0.0
    %222 = vmatprep.subr.mxu0 0.0
    %223 = vmatpush1.xpose.msra.mxu0 0.0
    %224 = vmatprep.subr.mxu0 0.0
    %225 = vmatpush1.xpose.msra.mxu0 0.0
    %226 = vmatprep.subr.mxu0 0.0
    %227 = vmatpush1.xpose.msra.mxu0 0.0
    %228 = vmatprep.subr.mxu0 0.0
    %229 = vmatpush1.xpose.msra.mxu0 0.0
    %230 = vmatprep.subr.mxu0 0.0
    %231 = vmatpush1.xpose.msra.mxu0 0.0
    %232 = vmatprep.subr.mxu0 0.0
    %233 = vmatpush1.xpose.msra.mxu0 0.0
    %234 = vmatprep.subr.mxu0 0.0
    %235 = vmatpush1.xpose.msra.mxu0 0.0
    %236 = vmatprep.subr.mxu0 0.0
    %237 = vmatpush1.xpose.msra.mxu0 0.0
    %238 = vmatprep.subr.mxu0 0.0
    %239 = vmatpush1.xpose.msra.mxu0 0.0
    %240 = vmatprep.subr.mxu0 0.0
    %241 = vmatpush1.xpose.msra.mxu0 0.0
    %242 = vmatprep.subr.mxu0 0.0
    %243 = vmatpush1.xpose.msra.mxu0 0.0
    %244 = vmatprep.subr.mxu0 0.0
    %245 = vmatpush1.xpose.msra.mxu0 0.0
    %246 = vmatprep.subr.mxu0 0.0
    %247 = vmatpush1.xpose.msra.mxu0 0.0
    %248 = vmatprep.subr.mxu0 0.0
    %249 = vmatpush1.xpose.msra.mxu0 0.0
    %250 = vmatprep.subr.mxu0 0.0
    %251 = vmatpush1.xpose.msra.mxu0 0.0
    %252 = vmatprep.subr.mxu0 0.0
    %253 = vmatpush1.xpose.msra.mxu0 0.0
    %254 = vmatprep.subr.mxu0 0.0
    %255 = vmatpush1.xpose.msra.mxu0 0.0
    %256 = vmatprep.subr.mxu0 0.0
    %257 = vmatpush1.xpose.msra.mxu0 0.0
    %258 = vmatprep.subr.mxu0 0.0
    %259 = vmatpush1.xpose.msra.mxu0 0.0
    %260 = vmatprep.subr.mxu0 0.0
    %261 = vmatpush1.xpose.msra.mxu0 0.0
    %262 = vmatprep.subr.mxu0 0.0
    %263 = vmatpush1.xpose.msra.mxu0 0.0
    %264 = vmatprep.subr.mxu0 0.0
    %265 = vmatpush1.xpose.msra.mxu0 0.0
    %266 = vmatprep.subr.mxu0 0.0
    %267 = vmatpush1.xpose.msra.mxu0 0.0
    %268 = vmatprep.subr.mxu0 0.0
    %269 = vmatpush1.xpose.msra.mxu0 0.0
    %270 = vmatprep.mubr.f32.mxu0 0.0
    %271 = vmatmul.mubr.f32.gmra.mrb[0].mxu0 %v198
    %v272 = vpop.f32.mrb[0].mxu0
    %v273 = vadd.f32 0.0, %v272
    %v274 = vpop.f32.mrb[0].mxu0
    %275 = vmatprep.mubr.f32.mxu0 0.0
    %276 = vmatmul.mubr.f32.gmra.mrb[0].mxu0 %v200
    %v277 = vpop.f32.mrb[0].mxu0
    %v278 = vadd.f32 0.0, %v277
    %v279 = vpop.f32.mrb[0].mxu0
    %280 = vdwg.mxu0
    %v281 = vlaneseq
    %v282 = vshrl.u32 %v281, 7
    %v283 = vadd.s32 %v282, 8
    %v284 = vlaneseq
    %v285 = vand.u32 %v284, 127
    %v286 = vcvt.s32.f32 %v282
    %v287 = vcvt.s32.f32 %v283
    %v288 = vadd.f32 %v286, 0.5
    %v289 = vadd.f32 %v287, 0.5
    %v290 = vmul.f32 %v288, 0.125
    %v291 = vmul.f32 %v289, 0.125
    %v292 = vfloor.f32 %v290
    %v293 = vfloor.f32 %v291
    %v294 = vcvt.s32.f32 %v285
    %v295 = vadd.f32 %v294, 0.5
    %v296 = vmul.f32 %v295, 0.125
    %v297 = vfloor.f32 %v296
    %vm298 = vcmp.eq.f32.partialorder %v292, %v297
    %vm299 = vcmp.eq.f32.partialorder %v293, %v297
    %v300 = vsel %vm298, %v273, -inf
    %v301 = vsel %vm299, %v278, -inf
    %vm302 = vcmask 130048
    %v303 = vsel %vm302, %v300, -inf
    %304 = vmax.xlane.f32.xlu0 %v303
    %v305 = vpop.xlane.xlu0 %304
    %v306 = vsel %vm302, %v301, -inf
    %307 = vmax.xlane.f32.xlu0 %v306
    %v308 = vpop.xlane.xlu0 %307
    %v309 = vsub.f32 %v300, %v305
    %v310 = vsub.f32 %v301, %v308
    %v311 = vmul.f32 %v309, 1.442695
    %v312 = vpow.pop %v311
    %v313 = vmul.f32 %v310, 1.442695
    %v314 = vpow.pop %v313
    %v315 = vsel %vm302, %v312, 0.0
    %316 = vadd.xlane.f32.xlu0 %v315
    %v317 = vpop.xlane.xlu0 %316
    %v318 = vsel %vm302, %v314, 0.0
    %319 = vadd.xlane.f32.xlu0 %v318
    %v320 = vpop.xlane.xlu0 %319
    %v321 = vrcp.pop %v317
    %v322 = vrcp.pop %v320
    %v323 = vmul.f32 %v312, %v321
    %v324 = vmul.f32 %v314, %v322
    %325 = vrot.lane.b32.xlu0 %v184, 64
    %v326 = vpop.permute.xlu0 %325
    %327 = vrot.lane.b32.xlu0 %v189, 64
    %v328 = vpop.permute.xlu0 %327
    %v332 = vsel %vm302, %v323, 0
    %v335 = vsel %vm302, %v324, 0
    %337 = vmatprep.subr.mxu0 0.0
    %338 = vmatpush1.msra.mxu0 %v326
    %339 = vmatprep.subr.mxu0 0.0
    %340 = vmatpush1.msra.mxu0 %v328
    %341 = vmatprep.subr.mxu0 0.0
    %342 = vmatpush1.msra.mxu0 0.0
    %343 = vmatprep.subr.mxu0 0.0
    %344 = vmatpush1.msra.mxu0 0.0
    %345 = vmatprep.subr.mxu0 0.0
    %346 = vmatpush1.msra.mxu0 0.0
    %347 = vmatprep.subr.mxu0 0.0
    %348 = vmatpush1.msra.mxu0 0.0
    %349 = vmatprep.subr.mxu0 0.0
    %350 = vmatpush1.msra.mxu0 0.0
    %351 = vmatprep.subr.mxu0 0.0
    %352 = vmatpush1.msra.mxu0 0.0
    %353 = vmatprep.subr.mxu0 0.0
    %354 = vmatpush1.msra.mxu0 0.0
    %355 = vmatprep.subr.mxu0 0.0
    %356 = vmatpush1.msra.mxu0 0.0
    %357 = vmatprep.subr.mxu0 0.0
    %358 = vmatpush1.msra.mxu0 0.0
    %359 = vmatprep.subr.mxu0 0.0
    %360 = vmatpush1.msra.mxu0 0.0
    %361 = vmatprep.subr.mxu0 0.0
    %362 = vmatpush1.msra.mxu0 0.0
    %363 = vmatprep.subr.mxu0 0.0
    %364 = vmatpush1.msra.mxu0 0.0
    %365 = vmatprep.subr.mxu0 0.0
    %366 = vmatpush1.msra.mxu0 0.0
    %367 = vmatprep.subr.mxu0 0.0
    %368 = vmatpush1.msra.mxu0 0.0
    %369 = vmatprep.subr.mxu0 0.0
    %370 = vmatpush1.msra.mxu0 0.0
    %371 = vmatprep.subr.mxu0 0.0
    %372 = vmatpush1.msra.mxu0 0.0
    %373 = vmatprep.subr.mxu0 0.0
    %374 = vmatpush1.msra.mxu0 0.0
    %375 = vmatprep.subr.mxu0 0.0
    %376 = vmatpush1.msra.mxu0 0.0
    %377 = vmatprep.subr.mxu0 0.0
    %378 = vmatpush1.msra.mxu0 0.0
    %379 = vmatprep.subr.mxu0 0.0
    %380 = vmatpush1.msra.mxu0 0.0
    %381 = vmatprep.subr.mxu0 0.0
    %382 = vmatpush1.msra.mxu0 0.0
    %383 = vmatprep.subr.mxu0 0.0
    %384 = vmatpush1.msra.mxu0 0.0
    %385 = vmatprep.subr.mxu0 0.0
    %386 = vmatpush1.msra.mxu0 0.0
    %387 = vmatprep.subr.mxu0 0.0
    %388 = vmatpush1.msra.mxu0 0.0
    %389 = vmatprep.subr.mxu0 0.0
    %390 = vmatpush1.msra.mxu0 0.0
    %391 = vmatprep.subr.mxu0 0.0
    %392 = vmatpush1.msra.mxu0 0.0
    %393 = vmatprep.subr.mxu0 0.0
    %394 = vmatpush1.msra.mxu0 0.0
    %395 = vmatprep.subr.mxu0 0.0
    %396 = vmatpush1.msra.mxu0 0.0
    %397 = vmatprep.subr.mxu0 0.0
    %398 = vmatpush1.msra.mxu0 0.0
    %399 = vmatprep.subr.mxu0 0.0
    %400 = vmatpush1.msra.mxu0 0.0
    %401 = vmatprep.mubr.f32.mxu0 0.0
    %402 = vmatmul.mubr.f32.gmra.mrb[0].mxu0 %v332
    %v403 = vpop.f32.mrb[0].mxu0
    %v404 = vadd.f32 0.0, %v403
    %v405 = vpop.f32.mrb[0].mxu0
    %406 = vmatprep.mubr.f32.mxu0 0.0
    %407 = vmatmul.mubr.f32.gmra.mrb[0].mxu0 %v335
    %v408 = vpop.f32.mrb[0].mxu0
    %v409 = vadd.f32 0.0, %v408
    %v410 = vpop.f32.mrb[0].mxu0
    %411 = vdwg.mxu0
    %v412 = vsel %vm54, %v404, 0.0
    %v413 = vrot.slane %v412, 4
    %v414 = vadd.f32 %v412, %v413
    %v415 = vrot.slane %v414, 2
    %v416 = vadd.f32 %v414, %v415
    %v417 = vrot.slane %v416, 1
    %v418 = vadd.f32 %v416, %v417
    %v419 = vsel %vm54, %v409, 0.0
    %v420 = vrot.slane %v419, 4
    %v421 = vadd.f32 %v419, %v420
    %v422 = vrot.slane %v421, 2
    %v423 = vadd.f32 %v421, %v422
    %v424 = vrot.slane %v423, 1
    %v425 = vadd.f32 %v423, %v424
    %v426 = vrcp.pop 8.0
    %v427 = vmul.f32 %v418, %v426
    %v428 = vmul.f32 %v425, %v426
    %vm431 = vcmask 1041409
    %v432 = vsel %vm431, %v428, %v427
    %vm434 = vcmask 254976
    %435 = vst.msk [vmem:[#allocation7] sm:$0x3] %vm434, %v432
    %v436 = vmul.f32 %v292, 8.0
    %v437 = vmul.f32 %v293, 8.0
    %v438 = vsub.f32 %v286, %v436
    %v439 = vsub.f32 %v287, %v437
    %vm440 = vcmp.eq.f32.partialorder %v438, %v294
    %vm441 = vcmp.eq.f32.partialorder %v439, %v294
    %v442 = vsel %vm440, 1, 0
    %v443 = vsel %vm441, 1, 0
    %v444 = vcvt.s32.f32 %v442
    %v445 = vcvt.s32.f32 %v443
    %446 = vmatprep.subr.mxu0 0.0
    %447 = vmatpush1.msra.mxu0 %v444
    %448 = vmatprep.subr.mxu0 0.0
    %449 = vmatpush1.msra.mxu0 %v445
    %450 = vmatprep.subr.mxu0 0.0
    %451 = vmatpush1.msra.mxu0 0.0
    %452 = vmatprep.subr.mxu0 0.0
    %453 = vmatpush1.msra.mxu0 0.0
    %454 = vmatprep.subr.mxu0 0.0
    %455 = vmatpush1.msra.mxu0 0.0
    %456 = vmatprep.subr.mxu0 0.0
    %457 = vmatpush1.msra.mxu0 0.0
    %458 = vmatprep.subr.mxu0 0.0
    %459 = vmatpush1.msra.mxu0 0.0
    %460 = vmatprep.subr.mxu0 0.0
    %461 = vmatpush1.msra.mxu0 0.0
    %462 = vmatprep.subr.mxu0 0.0
    %463 = vmatpush1.msra.mxu0 0.0
    %464 = vmatprep.subr.mxu0 0.0
    %465 = vmatpush1.msra.mxu0 0.0
    %466 = vmatprep.subr.mxu0 0.0
    %467 = vmatpush1.msra.mxu0 0.0
    %468 = vmatprep.subr.mxu0 0.0
    %469 = vmatpush1.msra.mxu0 0.0
    %470 = vmatprep.subr.mxu0 0.0
    %471 = vmatpush1.msra.mxu0 0.0
    %472 = vmatprep.subr.mxu0 0.0
    %473 = vmatpush1.msra.mxu0 0.0
    %474 = vmatprep.subr.mxu0 0.0
    %475 = vmatpush1.msra.mxu0 0.0
    %476 = vmatprep.subr.mxu0 0.0
    %477 = vmatpush1.msra.mxu0 0.0
    %478 = vmatprep.subr.mxu0 0.0
    %479 = vmatpush1.msra.mxu0 0.0
    %480 = vmatprep.subr.mxu0 0.0
    %481 = vmatpush1.msra.mxu0 0.0
    %482 = vmatprep.subr.mxu0 0.0
    %483 = vmatpush1.msra.mxu0 0.0
    %484 = vmatprep.subr.mxu0 0.0
    %485 = vmatpush1.msra.mxu0 0.0
    %486 = vmatprep.subr.mxu0 0.0
    %487 = vmatpush1.msra.mxu0 0.0
    %488 = vmatprep.subr.mxu0 0.0
    %489 = vmatpush1.msra.mxu0 0.0
    %490 = vmatprep.subr.mxu0 0.0
    %491 = vmatpush1.msra.mxu0 0.0
    %492 = vmatprep.subr.mxu0 0.0
    %493 = vmatpush1.msra.mxu0 0.0
    %494 = vmatprep.subr.mxu0 0.0
    %495 = vmatpush1.msra.mxu0 0.0
    %496 = vmatprep.subr.mxu0 0.0
    %497 = vmatpush1.msra.mxu0 0.0
    %498 = vmatprep.subr.mxu0 0.0
    %499 = vmatpush1.msra.mxu0 0.0
    %500 = vmatprep.subr.mxu0 0.0
    %501 = vmatpush1.msra.mxu0 0.0
    %502 = vmatprep.subr.mxu0 0.0
    %503 = vmatpush1.msra.mxu0 0.0
    %504 = vmatprep.subr.mxu0 0.0
    %505 = vmatpush1.msra.mxu0 0.0
    %506 = vmatprep.subr.mxu0 0.0
    %507 = vmatpush1.msra.mxu0 0.0
    %508 = vmatprep.subr.mxu0 0.0
    %509 = vmatpush1.msra.mxu0 0.0
    %510 = vmatprep.mubr.f32.mxu0 0.0
    %511 = vmatmul.mubr.f32.gmra.mrb[0].mxu0 %v332
    %v512 = vpop.f32.mrb[0].mxu0
    %v513 = vadd.f32 0.0, %v512
    %v514 = vpop.f32.mrb[0].mxu0
    %515 = vmatprep.mubr.f32.mxu0 0.0
    %516 = vmatmul.mubr.f32.gmra.mrb[0].mxu0 %v335
    %v517 = vpop.f32.mrb[0].mxu0
    %v518 = vadd.f32 0.0, %v517
    %v519 = vpop.f32.mrb[0].mxu0
    %520 = vdwg.mxu0
    %vm521 = vcmask 64512
    %522 = vst.msk [vmem:[#allocation8] sm:$0xff] %vm521, %v513
    %523 = vst.msk [vmem:[#allocation8 + $0x8] sm:$0xff] %vm521, %v518
    // Predicated region
    $region30: #{tpu_custom_call.1} parent=1 // pred_check
      _
    $region31: #{tpu_custom_call.1} parent=1 // pred_check_branch
      %525 = sbr.rel (0) target = $region33
    $region32: #{tpu_custom_call.1} parent=1 // pred_region
      %s527 = ssub.s32 32, 32
      %528 = vsyncadd [#allocation4], %s527
      %s530 = sshll.u32 [#allocation7], 4
      %s531 = int_to_ptr.vmem [resolvable:$true] %s530
      %533 = dma.vmem_to_hbm [thread:$0]  %s531, 32, %s5, [#allocation4]
    $region33: #{tpu_custom_call.1} parent=1 // pred_fallthru
      _
    // Predicated region
    $region34: #{tpu_custom_call.1} parent=1 // pred_check
      _
    $region35: #{tpu_custom_call.1} parent=1 // pred_check_branch
      %535 = sbr.rel (0) target = $region37
    $region36: #{tpu_custom_call.1} parent=1 // pred_region
      %s537 = ssub.s32 256, 256
      %538 = vsyncadd [#allocation9], %s537
      %s539 = sshll.u32 [#allocation8], 4
      %s540 = int_to_ptr.vmem [resolvable:$true] %s539
      %545 = dma.vmem_to_hbm [thread:$0]  %s540, 256, %s6, [#allocation9], 128, 128, 8
    $region37: #{tpu_custom_call.1} parent=1 // pred_fallthru
      _
    // Predicated region
    $region38: #{tpu_custom_call.1} parent=1 // pred_check
      _
    $region39: #{tpu_custom_call.1} parent=1 // pred_check_branch
      %547 = sbr.rel (0) target = $region41
    $region40: #{tpu_custom_call.1} parent=1 // pred_region
      %548 = dma.done [#allocation4], 32
    $region41: #{tpu_custom_call.1} parent=1 // pred_fallthru
      _
    // Predicated region
    $region42: #{tpu_custom_call.1} parent=1 // pred_check
      _
    $region43: #{tpu_custom_call.1} parent=1 // pred_check_branch
      %550 = sbr.rel (0) target = $region45
    $region44: #{tpu_custom_call.1} parent=1 // pred_region
      %551 = dma.done [#allocation9], 256
    $region45: #{tpu_custom_call.1} parent=1 // pred_fallthru
      _
    %552 = vsyncpa [#allocation3], 1
    %553 = vsyncpa [#allocation6], 1
    %554 = vsyncpa [#allocation4], 1
    %555 = vsyncpa [#allocation9], 1

// kernel: tpu_custom_call.1
$region0: #{tpu_custom_call.1}
  #allocation0 [shape = 'u32[]', space=smem, size = 0x4, offset = 0x4, fixed_abs, tag = 'smem constant byte address 0x4 - core index']
  #allocation1 [shape = 'u32[144,128]{1,0:T(1,128)}', space=vmem, size = 0x12000, scoped, tag = 'internal scratch']
  %s0 = inlined_call_operand.hbm [shape: f32[2,8,32], index: 0, kind: input, shape index: {}]
  %s1 = inlined_call_operand.vmem [shape: f32[1,32], index: 1, kind: input, shape index: {}]
  %s2 = inlined_call_operand.vmem [shape: f32[1,32], index: 2, kind: input, shape index: {}]
  %s3 = inlined_call_operand.hbm [shape: f32[32,96], index: 3, kind: input, shape index: {}]
  %s4 = inlined_call_operand.vmem [shape: f32[1,96], index: 4, kind: input, shape index: {}]
  %s5 = inlined_call_operand.hbm [shape: f32[2,32], index: 5, kind: output, shape index: {0}]
  %s6 = inlined_call_operand.hbm [shape: f32[2,8,8], index: 6, kind: output, shape index: {1}]
  %7 = xla_tuple %s5, %s6
  %s8 = sld [smem:[#allocation0]]
  $region46: #{tpu_custom_call.1} parent=0
    _
  %s10 = ssub.s32 1, %s8
  %s11 = scalar_select 0, %s10, %s8
  $region1: #{tpu_custom_call.1} parent=0
    #allocation2 [shape = 'u8[8192]{0}', space=vmem, size = 0x2000, scoped, tag = 'input window, operand 0, single buffered']
    #allocation3 [shape = 's32[1]{0}', space=sflag, size = 0x4, scoped, tag = 'scoped memory for tpu_custom_call.1']
    #allocation4 [shape = 's32[1]{0}', space=sflag, size = 0x4, scoped, tag = 'scoped memory for tpu_custom_call.1']
    #allocation5 [shape = 'u8[16384]{0}', space=vmem, size = 0x4000, scoped, tag = 'input window, operand 3, single buffered']
    #allocation6 [shape = 's32[1]{0}', space=sflag, size = 0x4, scoped, tag = 'scoped memory for tpu_custom_call.1']
    #allocation7 [shape = 'u8[1024]{0}', space=vmem, size = 0x400, scoped, tag = 'output window, operand 0, single buffered']
    #allocation8 [shape = 'u8[8192]{0}', space=vmem, size = 0x2000, scoped, tag = 'output window, operand 1, single buffered']
    #allocation9 [shape = 's32[1]{0}', space=sflag, size = 0x4, scoped, tag = 'scoped memory for tpu_custom_call.1']
    %12 = vsyncpa [#allocation3], 0
    %13 = vsyncpa [#allocation6], 0
    %14 = vsyncpa [#allocation4], 0
    %15 = vsyncpa [#allocation9], 0
    // Predicated region
    $region2: #{tpu_custom_call.1} parent=1 // pred_check
      _
    $region3: #{tpu_custom_call.1} parent=1 // pred_check_branch
      %17 = sbr.rel (0) target = $region5
    $region4: #{tpu_custom_call.1} parent=1 // pred_region
      %s19 = ssub.s32 256, 256
      %20 = vsyncadd [#allocation3], %s19
      %s21 = sshll.u32 [#allocation2], 4
      %s22 = int_to_ptr.vmem [resolvable:$true] %s21
      %27 = dma.hbm_to_vmem [thread:$0]  %s0, 256, %s22, [#allocation3], 128, 128, 8
    $region5: #{tpu_custom_call.1} parent=1 // pred_fallthru
      _
    // Predicated region
    $region6: #{tpu_custom_call.1} parent=1 // pred_check
      _
    $region7: #{tpu_custom_call.1} parent=1 // pred_check_branch
      %29 = sbr.rel (0) target = $region9
    $region8: #{tpu_custom_call.1} parent=1 // pred_region
      _
    $region9: #{tpu_custom_call.1} parent=1 // pred_fallthru
      _
    // Predicated region
    $region10: #{tpu_custom_call.1} parent=1 // pred_check
      _
    $region11: #{tpu_custom_call.1} parent=1 // pred_check_branch
      %31 = sbr.rel (0) target = $region13
    $region12: #{tpu_custom_call.1} parent=1 // pred_region
      _
    $region13: #{tpu_custom_call.1} parent=1 // pred_fallthru
      _
    // Predicated region
    $region14: #{tpu_custom_call.1} parent=1 // pred_check
      _
    $region15: #{tpu_custom_call.1} parent=1 // pred_check_branch
      %33 = sbr.rel (0) target = $region17
    $region16: #{tpu_custom_call.1} parent=1 // pred_region
      %s35 = ssub.s32 512, 512
      %36 = vsyncadd [#allocation6], %s35
      %s37 = sshll.u32 [#allocation5], 4
      %s38 = int_to_ptr.vmem [resolvable:$true] %s37
      %43 = dma.hbm_to_vmem [thread:$0]  %s3, 512, %s38, [#allocation6], 128, 128, 8
    $region17: #{tpu_custom_call.1} parent=1 // pred_fallthru
      _
    // Predicated region
    $region18: #{tpu_custom_call.1} parent=1 // pred_check
      _
    $region19: #{tpu_custom_call.1} parent=1 // pred_check_branch
      %45 = sbr.rel (0) target = $region21
    $region20: #{tpu_custom_call.1} parent=1 // pred_region
      _
    $region21: #{tpu_custom_call.1} parent=1 // pred_fallthru
      _
    // Predicated region
    $region22: #{tpu_custom_call.1} parent=1 // pred_check
      _
    $region23: #{tpu_custom_call.1} parent=1 // pred_check_branch
      %47 = sbr.rel (0) target = $region25
    $region24: #{tpu_custom_call.1} parent=1 // pred_region
      %48 = dma.done [#allocation3], 256
    $region25: #{tpu_custom_call.1} parent=1 // pred_fallthru
      _
    // Predicated region
    $region26: #{tpu_custom_call.1} parent=1 // pred_check
      _
    $region27: #{tpu_custom_call.1} parent=1 // pred_check_branch
      %50 = sbr.rel (0) target = $region29
    $region28: #{tpu_custom_call.1} parent=1 // pred_region
      %51 = dma.done [#allocation6], 512
    $region29: #{tpu_custom_call.1} parent=1 // pred_fallthru
      _
    %v52 = vld [vmem:[#allocation2] sm:$0xff]
    %v53 = vld [vmem:[#allocation2 + $0x8] sm:$0xff]
    %vm54 = vcmask 261120
    %v55 = vsel %vm54, %v52, 0.0
    %56 = vadd.xlane.f32.xlu0 %v55
    %v57 = vpop.xlane.xlu0 %56
    %v58 = vsel %vm54, %v53, 0.0
    %59 = vadd.xlane.f32.xlu0 %v58
    %v60 = vpop.xlane.xlu0 %59
    %v61 = vrcp.pop 32.0
    %v62 = vmul.f32 %v57, %v61
    %v63 = vmul.f32 %v60, %v61
    %v64 = vsub.f32 %v52, %v62
    %v65 = vsub.f32 %v53, %v63
    %v66 = vmul.f32 %v64, %v64
    %v67 = vmul.f32 %v65, %v65
    %v68 = vsel %vm54, %v66, 0.0
    %69 = vadd.xlane.f32.xlu0 %v68
    %v70 = vpop.xlane.xlu0 %69
    %v71 = vsel %vm54, %v67, 0.0
    %72 = vadd.xlane.f32.xlu0 %v71
    %v73 = vpop.xlane.xlu0 %72
    %v74 = vmul.f32 %v70, %v61
    %v75 = vmul.f32 %v73, %v61
    %v76 = vadd.f32 %v74, 1e-05
    %v77 = vadd.f32 %v75, 1e-05
    %v78 = vrsqrt.pop %v76
    %v79 = vrsqrt.pop %v77
    %v80 = vmul.f32 %v64, %v78
    %v81 = vmul.f32 %v65, %v79
    %v82 = vld [vmem:[%s1] sm:$0x1]
    %v84 = vlaneseq
    %v85 = vshrl.u32 %v84, 7
    %v86 = vsub.s32 0, %v85
    %v87 = vrot.slane %v82, %v86
    %v89 = vmul.f32 %v80, %v87
    %v90 = vmul.f32 %v81, %v87
    %v91 = vld [vmem:[%s2] sm:$0x1]
    %v93 = vlaneseq
    %v94 = vshrl.u32 %v93, 7
    %v95 = vsub.s32 0, %v94
    %v96 = vrot.slane %v91, %v95
    %v98 = vadd.f32 %v89, %v96
    %v99 = vadd.f32 %v90, %v96
    %v100 = vld [vmem:[#allocation5] sm:$0xff]
    %v101 = vld [vmem:[#allocation5 + $0x8] sm:$0xff]
    %v102 = vld [vmem:[#allocation5 + $0x10] sm:$0xff]
    %v103 = vld [vmem:[#allocation5 + $0x18] sm:$0xff]
    %v104 = vld [vmem:[%s4] sm:$0x1]
    %v106 = vlaneseq
    %v107 = vshrl.u32 %v106, 7
    %v108 = vsub.s32 0, %v107
    %v109 = vrot.slane %v104, %v108
    %v112 = vsel %vm54, %v98, 0
    %v115 = vsel %vm54, %v99, 0
    %117 = vmatprep.subr.mxu0 0.0
    %118 = vmatpush1.msra.mxu0 %v100
    %119 = vmatprep.subr.mxu0 0.0
    %120 = vmatpush1.msra.mxu0 %v101
    %121 = vmatprep.subr.mxu0 0.0
    %122 = vmatpush1.msra.mxu0 %v102
    %123 = vmatprep.subr.mxu0 0.0
    %124 = vmatpush1.msra.mxu0 %v103
    %125 = vmatprep.subr.mxu0 0.0
    %126 = vmatpush1.msra.mxu0 0.0
    %127 = vmatprep.subr.mxu0 0.0
    %128 = vmatpush1.msra.mxu0 0.0
    %129 = vmatprep.subr.mxu0 0.0
    %130 = vmatpush1.msra.mxu0 0.0
    %131 = vmatprep.subr.mxu0 0.0
    %132 = vmatpush1.msra.mxu0 0.0
    %133 = vmatprep.subr.mxu0 0.0
    %134 = vmatpush1.msra.mxu0 0.0
    %135 = vmatprep.subr.mxu0 0.0
    %136 = vmatpush1.msra.mxu0 0.0
    %137 = vmatprep.subr.mxu0 0.0
    %138 = vmatpush1.msra.mxu0 0.0
    %139 = vmatprep.subr.mxu0 0.0
    %140 = vmatpush1.msra.mxu0 0.0
    %141 = vmatprep.subr.mxu0 0.0
    %142 = vmatpush1.msra.mxu0 0.0
    %143 = vmatprep.subr.mxu0 0.0
    %144 = vmatpush1.msra.mxu0 0.0
    %145 = vmatprep.subr.mxu0 0.0
    %146 = vmatpush1.msra.mxu0 0.0
    %147 = vmatprep.subr.mxu0 0.0
    %148 = vmatpush1.msra.mxu0 0.0
    %149 = vmatprep.subr.mxu0 0.0
    %150 = vmatpush1.msra.mxu0 0.0
    %151 = vmatprep.subr.mxu0 0.0
    %152 = vmatpush1.msra.mxu0 0.0
    %153 = vmatprep.subr.mxu0 0.0
    %154 = vmatpush1.msra.mxu0 0.0
    %155 = vmatprep.subr.mxu0 0.0
    %156 = vmatpush1.msra.mxu0 0.0
    %157 = vmatprep.subr.mxu0 0.0
    %158 = vmatpush1.msra.mxu0 0.0
    %159 = vmatprep.subr.mxu0 0.0
    %160 = vmatpush1.msra.mxu0 0.0
    %161 = vmatprep.subr.mxu0 0.0
    %162 = vmatpush1.msra.mxu0 0.0
    %163 = vmatprep.subr.mxu0 0.0
    %164 = vmatpush1.msra.mxu0 0.0
    %165 = vmatprep.subr.mxu0 0.0
    %166 = vmatpush1.msra.mxu0 0.0
    %167 = vmatprep.subr.mxu0 0.0
    %168 = vmatpush1.msra.mxu0 0.0
    %169 = vmatprep.subr.mxu0 0.0
    %170 = vmatpush1.msra.mxu0 0.0
    %171 = vmatprep.subr.mxu0 0.0
    %172 = vmatpush1.msra.mxu0 0.0
    %173 = vmatprep.subr.mxu0 0.0
    %174 = vmatpush1.msra.mxu0 0.0
    %175 = vmatprep.subr.mxu0 0.0
    %176 = vmatpush1.msra.mxu0 0.0
    %177 = vmatprep.subr.mxu0 0.0
    %178 = vmatpush1.msra.mxu0 0.0
    %179 = vmatprep.subr.mxu0 0.0
    %180 = vmatpush1.msra.mxu0 0.0
    %181 = vmatprep.mubr.f32.mxu0 0.0
    %182 = vmatmul.mubr.f32.gmra.mrb[0].mxu0 %v112
    %v183 = vpop.f32.mrb[0].mxu0
    %v184 = vadd.f32 %v109, %v183
    %v185 = vpop.f32.mrb[0].mxu0
    %186 = vmatprep.mubr.f32.mxu0 0.0
    %187 = vmatmul.mubr.f32.gmra.mrb[0].mxu0 %v115
    %v188 = vpop.f32.mrb[0].mxu0
    %v189 = vadd.f32 %v109, %v188
    %v190 = vpop.f32.mrb[0].mxu0
    %191 = vdwg.mxu0
    %193 = vrot.lane.b32.xlu0 %v184, 96
    %v194 = vpop.permute.xlu0 %193
    %v195 = vsel %vm54, %v184, 0
    %v197 = vsel %vm54, %v194, 0
    %199 = vmatprep.subr.mxu0 0.0
    %200 = vmatpush1.xpose.msra.mxu0 %v197
    %201 = vmatprep.subr.mxu0 0.0
    %202 = vmatpush1.xpose.msra.mxu0 0.0
    %203 = vmatprep.subr.mxu0 0.0
    %204 = vmatpush1.xpose.msra.mxu0 0.0
    %205 = vmatprep.subr.mxu0 0.0
    %206 = vmatpush1.xpose.msra.mxu0 0.0
    %207 = vmatprep.subr.mxu0 0.0
    %208 = vmatpush1.xpose.msra.mxu0 0.0
    %209 = vmatprep.subr.mxu0 0.0
    %210 = vmatpush1.xpose.msra.mxu0 0.0
    %211 = vmatprep.subr.mxu0 0.0
    %212 = vmatpush1.xpose.msra.mxu0 0.0
    %213 = vmatprep.subr.mxu0 0.0
    %214 = vmatpush1.xpose.msra.mxu0 0.0
    %215 = vmatprep.subr.mxu0 0.0
    %216 = vmatpush1.xpose.msra.mxu0 0.0
    %217 = vmatprep.subr.mxu0 0.0
    %218 = vmatpush1.xpose.msra.mxu0 0.0
    %219 = vmatprep.subr.mxu0 0.0
    %220 = vmatpush1.xpose.msra.mxu0 0.0
    %221 = vmatprep.subr.mxu0 0.0
    %222 = vmatpush1.xpose.msra.mxu0 0.0
    %223 = vmatprep.subr.mxu0 0.0
    %224 = vmatpush1.xpose.msra.mxu0 0.0
    %225 = vmatprep.subr.mxu0 0.0
    %226 = vmatpush1.xpose.msra.mxu0 0.0
    %227 = vmatprep.subr.mxu0 0.0
    %228 = vmatpush1.xpose.msra.mxu0 0.0
    %229 = vmatprep.subr.mxu0 0.0
    %230 = vmatpush1.xpose.msra.mxu0 0.0
    %231 = vmatprep.subr.mxu0 0.0
    %232 = vmatpush1.xpose.msra.mxu0 0.0
    %233 = vmatprep.subr.mxu0 0.0
    %234 = vmatpush1.xpose.msra.mxu0 0.0
    %235 = vmatprep.subr.mxu0 0.0
    %236 = vmatpush1.xpose.msra.mxu0 0.0
    %237 = vmatprep.subr.mxu0 0.0
    %238 = vmatpush1.xpose.msra.mxu0 0.0
    %239 = vmatprep.subr.mxu0 0.0
    %240 = vmatpush1.xpose.msra.mxu0 0.0
    %241 = vmatprep.subr.mxu0 0.0
    %242 = vmatpush1.xpose.msra.mxu0 0.0
    %243 = vmatprep.subr.mxu0 0.0
    %244 = vmatpush1.xpose.msra.mxu0 0.0
    %245 = vmatprep.subr.mxu0 0.0
    %246 = vmatpush1.xpose.msra.mxu0 0.0
    %247 = vmatprep.subr.mxu0 0.0
    %248 = vmatpush1.xpose.msra.mxu0 0.0
    %249 = vmatprep.subr.mxu0 0.0
    %250 = vmatpush1.xpose.msra.mxu0 0.0
    %251 = vmatprep.subr.mxu0 0.0
    %252 = vmatpush1.xpose.msra.mxu0 0.0
    %253 = vmatprep.subr.mxu0 0.0
    %254 = vmatpush1.xpose.msra.mxu0 0.0
    %255 = vmatprep.subr.mxu0 0.0
    %256 = vmatpush1.xpose.msra.mxu0 0.0
    %257 = vmatprep.subr.mxu0 0.0
    %258 = vmatpush1.xpose.msra.mxu0 0.0
    %259 = vmatprep.subr.mxu0 0.0
    %260 = vmatpush1.xpose.msra.mxu0 0.0
    %261 = vmatprep.subr.mxu0 0.0
    %262 = vmatpush1.xpose.msra.mxu0 0.0
    %263 = vmatprep.mubr.f32.mxu0 0.0
    %264 = vmatmul.mubr.f32.gmra.mrb[0].mxu0 %v195
    %v265 = vpop.f32.mrb[0].mxu0
    %v266 = vadd.f32 0.0, %v265
    %v267 = vpop.f32.mrb[0].mxu0
    %268 = vdwg.mxu0
    %270 = vrot.lane.b32.xlu0 %v189, 96
    %v271 = vpop.permute.xlu0 %270
    %v272 = vsel %vm54, %v189, 0
    %v274 = vsel %vm54, %v271, 0
    %276 = vmatprep.subr.mxu0 0.0
    %277 = vmatpush1.xpose.msra.mxu0 %v274
    %278 = vmatprep.subr.mxu0 0.0
    %279 = vmatpush1.xpose.msra.mxu0 0.0
    %280 = vmatprep.subr.mxu0 0.0
    %281 = vmatpush1.xpose.msra.mxu0 0.0
    %282 = vmatprep.subr.mxu0 0.0
    %283 = vmatpush1.xpose.msra.mxu0 0.0
    %284 = vmatprep.subr.mxu0 0.0
    %285 = vmatpush1.xpose.msra.mxu0 0.0
    %286 = vmatprep.subr.mxu0 0.0
    %287 = vmatpush1.xpose.msra.mxu0 0.0
    %288 = vmatprep.subr.mxu0 0.0
    %289 = vmatpush1.xpose.msra.mxu0 0.0
    %290 = vmatprep.subr.mxu0 0.0
    %291 = vmatpush1.xpose.msra.mxu0 0.0
    %292 = vmatprep.subr.mxu0 0.0
    %293 = vmatpush1.xpose.msra.mxu0 0.0
    %294 = vmatprep.subr.mxu0 0.0
    %295 = vmatpush1.xpose.msra.mxu0 0.0
    %296 = vmatprep.subr.mxu0 0.0
    %297 = vmatpush1.xpose.msra.mxu0 0.0
    %298 = vmatprep.subr.mxu0 0.0
    %299 = vmatpush1.xpose.msra.mxu0 0.0
    %300 = vmatprep.subr.mxu0 0.0
    %301 = vmatpush1.xpose.msra.mxu0 0.0
    %302 = vmatprep.subr.mxu0 0.0
    %303 = vmatpush1.xpose.msra.mxu0 0.0
    %304 = vmatprep.subr.mxu0 0.0
    %305 = vmatpush1.xpose.msra.mxu0 0.0
    %306 = vmatprep.subr.mxu0 0.0
    %307 = vmatpush1.xpose.msra.mxu0 0.0
    %308 = vmatprep.subr.mxu0 0.0
    %309 = vmatpush1.xpose.msra.mxu0 0.0
    %310 = vmatprep.subr.mxu0 0.0
    %311 = vmatpush1.xpose.msra.mxu0 0.0
    %312 = vmatprep.subr.mxu0 0.0
    %313 = vmatpush1.xpose.msra.mxu0 0.0
    %314 = vmatprep.subr.mxu0 0.0
    %315 = vmatpush1.xpose.msra.mxu0 0.0
    %316 = vmatprep.subr.mxu0 0.0
    %317 = vmatpush1.xpose.msra.mxu0 0.0
    %318 = vmatprep.subr.mxu0 0.0
    %319 = vmatpush1.xpose.msra.mxu0 0.0
    %320 = vmatprep.subr.mxu0 0.0
    %321 = vmatpush1.xpose.msra.mxu0 0.0
    %322 = vmatprep.subr.mxu0 0.0
    %323 = vmatpush1.xpose.msra.mxu0 0.0
    %324 = vmatprep.subr.mxu0 0.0
    %325 = vmatpush1.xpose.msra.mxu0 0.0
    %326 = vmatprep.subr.mxu0 0.0
    %327 = vmatpush1.xpose.msra.mxu0 0.0
    %328 = vmatprep.subr.mxu0 0.0
    %329 = vmatpush1.xpose.msra.mxu0 0.0
    %330 = vmatprep.subr.mxu0 0.0
    %331 = vmatpush1.xpose.msra.mxu0 0.0
    %332 = vmatprep.subr.mxu0 0.0
    %333 = vmatpush1.xpose.msra.mxu0 0.0
    %334 = vmatprep.subr.mxu0 0.0
    %335 = vmatpush1.xpose.msra.mxu0 0.0
    %336 = vmatprep.subr.mxu0 0.0
    %337 = vmatpush1.xpose.msra.mxu0 0.0
    %338 = vmatprep.subr.mxu0 0.0
    %339 = vmatpush1.xpose.msra.mxu0 0.0
    %340 = vmatprep.mubr.f32.mxu0 0.0
    %341 = vmatmul.mubr.f32.gmra.mrb[0].mxu0 %v272
    %v342 = vpop.f32.mrb[0].mxu0
    %v343 = vadd.f32 0.0, %v342
    %v344 = vpop.f32.mrb[0].mxu0
    %345 = vdwg.mxu0
    %vm346 = vcmask 64512
    %v347 = vsel %vm346, %v266, -inf
    %348 = vmax.xlane.f32.xlu0 %v347
    %v349 = vpop.xlane.xlu0 %348
    %v350 = vsel %vm346, %v343, -inf
    %351 = vmax.xlane.f32.xlu0 %v350
    %v352 = vpop.xlane.xlu0 %351
    %v353 = vsub.f32 %v266, %v349
    %v354 = vsub.f32 %v343, %v352
    %v355 = vmul.f32 %v353, 1.442695
    %v356 = vpow.pop %v355
    %v357 = vmul.f32 %v354, 1.442695
    %v358 = vpow.pop %v357
    %v359 = vsel %vm346, %v356, 0.0
    %360 = vadd.xlane.f32.xlu0 %v359
    %v361 = vpop.xlane.xlu0 %360
    %v362 = vsel %vm346, %v358, 0.0
    %363 = vadd.xlane.f32.xlu0 %v362
    %v364 = vpop.xlane.xlu0 %363
    %v365 = vrcp.pop %v361
    %v366 = vrcp.pop %v364
    %v367 = vmul.f32 %v356, %v365
    %v368 = vmul.f32 %v358, %v366
    %369 = vrot.lane.b32.xlu0 %v184, 64
    %v370 = vpop.permute.xlu0 %369
    %v373 = vsel %vm346, %v367, 0
    %375 = vmatprep.subr.mxu0 0.0
    %376 = vmatpush1.msra.mxu0 %v370
    %377 = vmatprep.subr.mxu0 0.0
    %378 = vmatpush1.msra.mxu0 0.0
    %379 = vmatprep.subr.mxu0 0.0
    %380 = vmatpush1.msra.mxu0 0.0
    %381 = vmatprep.subr.mxu0 0.0
    %382 = vmatpush1.msra.mxu0 0.0
    %383 = vmatprep.subr.mxu0 0.0
    %384 = vmatpush1.msra.mxu0 0.0
    %385 = vmatprep.subr.mxu0 0.0
    %386 = vmatpush1.msra.mxu0 0.0
    %387 = vmatprep.subr.mxu0 0.0
    %388 = vmatpush1.msra.mxu0 0.0
    %389 = vmatprep.subr.mxu0 0.0
    %390 = vmatpush1.msra.mxu0 0.0
    %391 = vmatprep.subr.mxu0 0.0
    %392 = vmatpush1.msra.mxu0 0.0
    %393 = vmatprep.subr.mxu0 0.0
    %394 = vmatpush1.msra.mxu0 0.0
    %395 = vmatprep.subr.mxu0 0.0
    %396 = vmatpush1.msra.mxu0 0.0
    %397 = vmatprep.subr.mxu0 0.0
    %398 = vmatpush1.msra.mxu0 0.0
    %399 = vmatprep.subr.mxu0 0.0
    %400 = vmatpush1.msra.mxu0 0.0
    %401 = vmatprep.subr.mxu0 0.0
    %402 = vmatpush1.msra.mxu0 0.0
    %403 = vmatprep.subr.mxu0 0.0
    %404 = vmatpush1.msra.mxu0 0.0
    %405 = vmatprep.subr.mxu0 0.0
    %406 = vmatpush1.msra.mxu0 0.0
    %407 = vmatprep.subr.mxu0 0.0
    %408 = vmatpush1.msra.mxu0 0.0
    %409 = vmatprep.subr.mxu0 0.0
    %410 = vmatpush1.msra.mxu0 0.0
    %411 = vmatprep.subr.mxu0 0.0
    %412 = vmatpush1.msra.mxu0 0.0
    %413 = vmatprep.subr.mxu0 0.0
    %414 = vmatpush1.msra.mxu0 0.0
    %415 = vmatprep.subr.mxu0 0.0
    %416 = vmatpush1.msra.mxu0 0.0
    %417 = vmatprep.subr.mxu0 0.0
    %418 = vmatpush1.msra.mxu0 0.0
    %419 = vmatprep.subr.mxu0 0.0
    %420 = vmatpush1.msra.mxu0 0.0
    %421 = vmatprep.subr.mxu0 0.0
    %422 = vmatpush1.msra.mxu0 0.0
    %423 = vmatprep.subr.mxu0 0.0
    %424 = vmatpush1.msra.mxu0 0.0
    %425 = vmatprep.subr.mxu0 0.0
    %426 = vmatpush1.msra.mxu0 0.0
    %427 = vmatprep.subr.mxu0 0.0
    %428 = vmatpush1.msra.mxu0 0.0
    %429 = vmatprep.subr.mxu0 0.0
    %430 = vmatpush1.msra.mxu0 0.0
    %431 = vmatprep.subr.mxu0 0.0
    %432 = vmatpush1.msra.mxu0 0.0
    %433 = vmatprep.subr.mxu0 0.0
    %434 = vmatpush1.msra.mxu0 0.0
    %435 = vmatprep.subr.mxu0 0.0
    %436 = vmatpush1.msra.mxu0 0.0
    %437 = vmatprep.subr.mxu0 0.0
    %438 = vmatpush1.msra.mxu0 0.0
    %439 = vmatprep.mubr.f32.mxu0 0.0
    %440 = vmatmul.mubr.f32.gmra.mrb[0].mxu0 %v373
    %v441 = vpop.f32.mrb[0].mxu0
    %v442 = vadd.f32 0.0, %v441
    %v443 = vpop.f32.mrb[0].mxu0
    %444 = vdwg.mxu0
    %445 = vrot.lane.b32.xlu0 %v189, 64
    %v446 = vpop.permute.xlu0 %445
    %v449 = vsel %vm346, %v368, 0
    %451 = vmatprep.subr.mxu0 0.0
    %452 = vmatpush1.msra.mxu0 %v446
    %453 = vmatprep.subr.mxu0 0.0
    %454 = vmatpush1.msra.mxu0 0.0
    %455 = vmatprep.subr.mxu0 0.0
    %456 = vmatpush1.msra.mxu0 0.0
    %457 = vmatprep.subr.mxu0 0.0
    %458 = vmatpush1.msra.mxu0 0.0
    %459 = vmatprep.subr.mxu0 0.0
    %460 = vmatpush1.msra.mxu0 0.0
    %461 = vmatprep.subr.mxu0 0.0
    %462 = vmatpush1.msra.mxu0 0.0
    %463 = vmatprep.subr.mxu0 0.0
    %464 = vmatpush1.msra.mxu0 0.0
    %465 = vmatprep.subr.mxu0 0.0
    %466 = vmatpush1.msra.mxu0 0.0
    %467 = vmatprep.subr.mxu0 0.0
    %468 = vmatpush1.msra.mxu0 0.0
    %469 = vmatprep.subr.mxu0 0.0
    %470 = vmatpush1.msra.mxu0 0.0
    %471 = vmatprep.subr.mxu0 0.0
    %472 = vmatpush1.msra.mxu0 0.0
    %473 = vmatprep.subr.mxu0 0.0
    %474 = vmatpush1.msra.mxu0 0.0
    %475 = vmatprep.subr.mxu0 0.0
    %476 = vmatpush1.msra.mxu0 0.0
    %477 = vmatprep.subr.mxu0 0.0
    %478 = vmatpush1.msra.mxu0 0.0
    %479 = vmatprep.subr.mxu0 0.0
    %480 = vmatpush1.msra.mxu0 0.0
    %481 = vmatprep.subr.mxu0 0.0
    %482 = vmatpush1.msra.mxu0 0.0
    %483 = vmatprep.subr.mxu0 0.0
    %484 = vmatpush1.msra.mxu0 0.0
    %485 = vmatprep.subr.mxu0 0.0
    %486 = vmatpush1.msra.mxu0 0.0
    %487 = vmatprep.subr.mxu0 0.0
    %488 = vmatpush1.msra.mxu0 0.0
    %489 = vmatprep.subr.mxu0 0.0
    %490 = vmatpush1.msra.mxu0 0.0
    %491 = vmatprep.subr.mxu0 0.0
    %492 = vmatpush1.msra.mxu0 0.0
    %493 = vmatprep.subr.mxu0 0.0
    %494 = vmatpush1.msra.mxu0 0.0
    %495 = vmatprep.subr.mxu0 0.0
    %496 = vmatpush1.msra.mxu0 0.0
    %497 = vmatprep.subr.mxu0 0.0
    %498 = vmatpush1.msra.mxu0 0.0
    %499 = vmatprep.subr.mxu0 0.0
    %500 = vmatpush1.msra.mxu0 0.0
    %501 = vmatprep.subr.mxu0 0.0
    %502 = vmatpush1.msra.mxu0 0.0
    %503 = vmatprep.subr.mxu0 0.0
    %504 = vmatpush1.msra.mxu0 0.0
    %505 = vmatprep.subr.mxu0 0.0
    %506 = vmatpush1.msra.mxu0 0.0
    %507 = vmatprep.subr.mxu0 0.0
    %508 = vmatpush1.msra.mxu0 0.0
    %509 = vmatprep.subr.mxu0 0.0
    %510 = vmatpush1.msra.mxu0 0.0
    %511 = vmatprep.subr.mxu0 0.0
    %512 = vmatpush1.msra.mxu0 0.0
    %513 = vmatprep.subr.mxu0 0.0
    %514 = vmatpush1.msra.mxu0 0.0
    %515 = vmatprep.mubr.f32.mxu0 0.0
    %516 = vmatmul.mubr.f32.gmra.mrb[0].mxu0 %v449
    %v517 = vpop.f32.mrb[0].mxu0
    %v518 = vadd.f32 0.0, %v517
    %v519 = vpop.f32.mrb[0].mxu0
    %520 = vdwg.mxu0
    %v521 = vsel %vm54, %v442, 0.0
    %v522 = vrot.slane %v521, 4
    %v523 = vadd.f32 %v521, %v522
    %v524 = vrot.slane %v523, 2
    %v525 = vadd.f32 %v523, %v524
    %v526 = vrot.slane %v525, 1
    %v527 = vadd.f32 %v525, %v526
    %v528 = vsel %vm54, %v518, 0.0
    %v529 = vrot.slane %v528, 4
    %v530 = vadd.f32 %v528, %v529
    %v531 = vrot.slane %v530, 2
    %v532 = vadd.f32 %v530, %v531
    %v533 = vrot.slane %v532, 1
    %v534 = vadd.f32 %v532, %v533
    %v535 = vrcp.pop 8.0
    %v536 = vmul.f32 %v527, %v535
    %v537 = vmul.f32 %v534, %v535
    %vm540 = vcmask 1041409
    %v541 = vsel %vm540, %v537, %v536
    %vm543 = vcmask 254976
    %544 = vst.msk [vmem:[#allocation7] sm:$0x3] %vm543, %v541
    %545 = vst.msk [vmem:[#allocation8] sm:$0xff] %vm346, %v367
    %546 = vst.msk [vmem:[#allocation8 + $0x8] sm:$0xff] %vm346, %v368
    // Predicated region
    $region30: #{tpu_custom_call.1} parent=1 // pred_check
      _
    $region31: #{tpu_custom_call.1} parent=1 // pred_check_branch
      %548 = sbr.rel (0) target = $region33
    $region32: #{tpu_custom_call.1} parent=1 // pred_region
      %s550 = ssub.s32 32, 32
      %551 = vsyncadd [#allocation4], %s550
      %s553 = sshll.u32 [#allocation7], 4
      %s554 = int_to_ptr.vmem [resolvable:$true] %s553
      %556 = dma.vmem_to_hbm [thread:$0]  %s554, 32, %s5, [#allocation4]
    $region33: #{tpu_custom_call.1} parent=1 // pred_fallthru
      _
    // Predicated region
    $region34: #{tpu_custom_call.1} parent=1 // pred_check
      _
    $region35: #{tpu_custom_call.1} parent=1 // pred_check_branch
      %558 = sbr.rel (0) target = $region37
    $region36: #{tpu_custom_call.1} parent=1 // pred_region
      %s560 = ssub.s32 256, 256
      %561 = vsyncadd [#allocation9], %s560
      %s562 = sshll.u32 [#allocation8], 4
      %s563 = int_to_ptr.vmem [resolvable:$true] %s562
      %568 = dma.vmem_to_hbm [thread:$0]  %s563, 256, %s6, [#allocation9], 128, 128, 8
    $region37: #{tpu_custom_call.1} parent=1 // pred_fallthru
      _
    // Predicated region
    $region38: #{tpu_custom_call.1} parent=1 // pred_check
      _
    $region39: #{tpu_custom_call.1} parent=1 // pred_check_branch
      %570 = sbr.rel (0) target = $region41
    $region40: #{tpu_custom_call.1} parent=1 // pred_region
      %571 = dma.done [#allocation4], 32
    $region41: #{tpu_custom_call.1} parent=1 // pred_fallthru
      _
    // Predicated region
    $region42: #{tpu_custom_call.1} parent=1 // pred_check
      _
    $region43: #{tpu_custom_call.1} parent=1 // pred_check_branch
      %573 = sbr.rel (0) target = $region45
    $region44: #{tpu_custom_call.1} parent=1 // pred_region
      %574 = dma.done [#allocation9], 256
    $region45: #{tpu_custom_call.1} parent=1 // pred_fallthru
      _
    %575 = vsyncpa [#allocation3], 1
    %576 = vsyncpa [#allocation6], 1
    %577 = vsyncpa [#allocation4], 1
    %578 = vsyncpa [#allocation9], 1

</llo_original>
